<compile_context>
chip_gen: v7x
topology: tpu7x:2x2x1
jax: 0.10.0
libtpu: 0.0.40
codegen_flags: <defaults>
</compile_context>

<pallas_src>
import functools
import math

import jax
import jax.numpy as jnp
from jax.experimental import pallas as pl
from jax.experimental.pallas import tpu as pltpu


# -------------------- Kernel 1: fused QKV projection + chunk-wise RoPE --------------------

def qkv_rope_kernel(x_ref, w_ref, cos_ref, sin_e_ref, sin_o_ref, out_ref,
                    *, n_heads, d_k, d_out):
    x = x_ref[0]                                                       # (TS, d_in)
    # One wide matmul (N = 3*d_out) keeps the MXU full; weights pre-transposed
    # and the q columns pre-scaled by 1/sqrt(d_k) host-side.
    qkv = jnp.dot(x, w_ref[...], preferred_element_type=jnp.float32)   # (TS, 3*d_out) f32
    cos = cos_ref[...]                                                 # (TS, d_k)
    sin_e = sin_e_ref[...]                                             # sin, even lanes only
    sin_o = sin_o_ref[...]                                             # sin, odd lanes only
    parts = []
    # RoPE per 128-lane head chunk (single-vreg-wide XLU rolls), q/k only.
    for c in range(2 * n_heads):
        chunk = qkv[:, c * d_k:(c + 1) * d_k]                          # (TS, d_k)
        nxt = pltpu.roll(chunk, shift=d_k - 1, axis=1)                 # chunk[:, j+1] at lane j
        prv = pltpu.roll(chunk, shift=1, axis=1)                       # chunk[:, j-1] at lane j
        # wraparound lanes are killed by the even/odd masking of sin_e / sin_o
        parts.append(chunk * cos + nxt * sin_e + prv * sin_o)
    parts.append(qkv[:, 2 * d_out:])                                   # v section: no RoPE
    # Single lane-dense store of the whole (TS, 3*d_out) slab.
    out_ref[0] = jnp.concatenate(parts, axis=1).astype(out_ref.dtype)


# -------------------- Kernel 2: causal flash attention (triangular grid) ------------------

def flash_attn_kernel(qi_ref, ki_ref, q_ref, k_ref, v_ref, o_ref,
                      m_sc, l_sc, acc_sc, *, q_tile, kv_tile):
    t = pl.program_id(2)
    qi = qi_ref[t]          # q-tile index for this triangular step
    ki = ki_ref[t]          # kv-tile index for this triangular step (0 <= ki <= qi)

    @pl.when(ki == 0)
    def _init():
        m_sc[...] = jnp.full(m_sc.shape, -jnp.inf, dtype=jnp.float32)
        l_sc[...] = jnp.zeros(l_sc.shape, dtype=jnp.float32)
        acc_sc[...] = jnp.zeros(acc_sc.shape, dtype=jnp.float32)

    q = q_ref[0]                                           # (TQ, d_k)  (already 1/sqrt(d_k)-scaled)
    k = k_ref[0]                                           # (TK, d_k)
    v = v_ref[0]                                           # (TK, d_k)
    s = jax.lax.dot_general(q, k, (((1,), (1,)), ((), ())),
                            preferred_element_type=jnp.float32)        # (TQ, TK)

    def online_update(s_tile):
        m_prev = m_sc[...]
        m_new = jnp.maximum(m_prev, jnp.max(s_tile, axis=-1, keepdims=True))
        alpha = jnp.exp(m_prev - m_new)
        p = jnp.exp(s_tile - m_new)
        l_sc[...] = alpha * l_sc[...] + jnp.sum(p, axis=-1, keepdims=True)
        acc_sc[...] = alpha * acc_sc[...] + jnp.dot(
            p.astype(v.dtype), v, preferred_element_type=jnp.float32)
        m_sc[...] = m_new

    is_diag = ki == qi

    @pl.when(is_diag)
    def _diag():
        # Only the diagonal tile straddles the causal boundary (q_tile == kv_tile),
        # so the mask is purely local; every row keeps >= 1 unmasked column, so a
        # finite fill is safe (masked lanes underflow to exactly 0 in exp).
        row = jax.lax.broadcasted_iota(jnp.int32, s.shape, 0)
        col = jax.lax.broadcasted_iota(jnp.int32, s.shape, 1)
        online_update(jnp.where(row >= col, s, jnp.float32(-1e30)))

    @pl.when(ki < qi)
    def _interior():
        online_update(s)                                   # unmasked fast path

    @pl.when(is_diag)                                      # diagonal is the last kv step of the row
    def _finalize():
        inv_l = pl.reciprocal(l_sc[...], approx=True)      # EUP; frees VPU slots
        o_ref[0] = (acc_sc[...] * inv_l).astype(o_ref.dtype)


# -------------------- Kernel 3: output projection (single fat matmul) ---------------------

def out_proj_kernel(ctx_ref, wo_ref, o_ref):
    # ctx already has heads merged on the lane axis: (TS, d_out) @ (d_out, d_out).
    o_ref[0] = jnp.dot(ctx_ref[0], wo_ref[...],
                       preferred_element_type=jnp.float32).astype(o_ref.dtype)


# -------------------- host-side wrapper ----------------------------------------------------

def make_rope_tables(theta, d_k, context_length):
    i = jnp.arange(context_length, dtype=jnp.float32)
    k = (jnp.arange(d_k) // 2).astype(jnp.float32)
    thetas = i[:, None] / jnp.power(jnp.float32(theta), 2.0 * k / d_k)
    cos = jnp.cos(thetas)
    sin = jnp.sin(thetas)
    even_signs = jnp.where(jnp.arange(d_k) % 2 == 0, -1.0, 1.0).astype(jnp.float32)
    return cos, sin * even_signs            # sin pre-sign-adjusted, as in the module


def causal_mha_pallas(x, wq, wk, wv, wo, cos_tab, sin_tab, token_positions, n_heads,
                      *, seq_tile=128, q_tile=128, kv_tile=128,
                      compute_dtype=jnp.bfloat16):
    B, S, d_in = x.shape
    d_out = wq.shape[0]
    d_k = d_out // n_heads
    seq_tile = min(seq_tile, S)
    q_tile = min(q_tile, S)
    kv_tile = min(kv_tile, S)
    assert d_out % n_heads == 0 and d_k % 2 == 0
    assert d_k % 128 == 0, "per-head chunks must be lane-aligned (d_k multiple of 128)"
    assert S % seq_tile == 0 and S % q_tile == 0 and S % kv_tile == 0
    assert q_tile == kv_tile  # diagonal-only masking + finite mask fill rely on this

    scale = 1.0 / math.sqrt(d_k)
    # Fused, pre-transposed projection weight; softmax scale folded into the q columns.
    wqkv_t = jnp.concatenate([(wq * scale).T, wk.T, wv.T], axis=1).astype(compute_dtype)  # (d_in, 3*d_out)
    wo_t = wo.T.astype(compute_dtype)                                                     # (d_out, d_out)

    # Compact RoPE tables: only (S, d_k), shared by every q/k head chunk.
    cos_s = cos_tab[token_positions].astype(jnp.float32)           # (S, d_k)
    sin_s = sin_tab[token_positions].astype(jnp.float32)           # (S, d_k), sign-adjusted
    lane = jnp.arange(d_k)
    sin_e = jnp.where((lane % 2 == 0)[None, :], sin_s, 0.0)
    sin_o = jnp.where((lane % 2 == 1)[None, :], sin_s, 0.0)

    n_s = S // seq_tile

    # ---- kernel 1: fused QKV projection + RoPE, lane-dense (B, S, 3*d_out) slab -----------
    # Grid (n_s, B): B innermost, so the s-indexed RoPE table blocks are reused
    # across the batch without re-DMA; the weight block is constant (resident).
    qkv = pl.pallas_call(
        functools.partial(qkv_rope_kernel, n_heads=n_heads, d_k=d_k, d_out=d_out),
        out_shape=jax.ShapeDtypeStruct((B, S, 3 * d_out), compute_dtype),
        grid=(n_s, B),
        in_specs=[
            pl.BlockSpec((1, seq_tile, d_in), lambda s, b: (b, s, 0)),
            pl.BlockSpec((d_in, 3 * d_out), lambda s, b: (0, 0)),
            pl.BlockSpec((seq_tile, d_k), lambda s, b: (s, 0)),
            pl.BlockSpec((seq_tile, d_k), lambda s, b: (s, 0)),
            pl.BlockSpec((seq_tile, d_k), lambda s, b: (s, 0)),
        ],
        out_specs=pl.BlockSpec((1, seq_tile, 3 * d_out), lambda s, b: (b, s, 0)),
        compiler_params=pltpu.CompilerParams(
            dimension_semantics=("parallel", "parallel")),
    )(x.astype(compute_dtype), wqkv_t, cos_s, sin_e, sin_o)

    # ---- kernel 2: causal flash attention over a triangular grid ---------------------------
    n_q = S // q_tile
    n_tri = n_q * (n_q + 1) // 2
    qi_list, ki_list = [], []
    for qb in range(n_q):
        for kb in range(qb + 1):            # only causal (qi, ki) pairs; ki innermost
            qi_list.append(qb)
            ki_list.append(kb)
    qi_idx = jnp.asarray(qi_list, dtype=jnp.int32)
    ki_idx = jnp.asarray(ki_list, dtype=jnp.int32)

    ctx = pl.pallas_call(
        functools.partial(flash_attn_kernel, q_tile=q_tile, kv_tile=kv_tile),
        out_shape=jax.ShapeDtypeStruct((B, S, d_out), compute_dtype),
        grid_spec=pltpu.PrefetchScalarGridSpec(
            num_scalar_prefetch=2,
            grid=(B, n_heads, n_tri),
            in_specs=[
                # q / k / v for head h live at last-dim block h / n_heads+h / 2*n_heads+h.
                pl.BlockSpec((1, q_tile, d_k),
                             lambda b, h, t, qi, ki: (b, qi[t], h)),
                pl.BlockSpec((1, kv_tile, d_k),
                             lambda b, h, t, qi, ki: (b, ki[t], n_heads + h)),
                pl.BlockSpec((1, kv_tile, d_k),
                             lambda b, h, t, qi, ki: (b, ki[t], 2 * n_heads + h)),
            ],
            # Heads are written onto the lane axis -> ctx is already "merged".
            out_specs=pl.BlockSpec((1, q_tile, d_k),
                                   lambda b, h, t, qi, ki: (b, qi[t], h)),
            scratch_shapes=[
                pltpu.VMEM((q_tile, 1), jnp.float32),     # running max
                pltpu.VMEM((q_tile, 1), jnp.float32),     # running denominator
                pltpu.VMEM((q_tile, d_k), jnp.float32),   # running numerator
            ],
        ),
        compiler_params=pltpu.CompilerParams(
            dimension_semantics=("parallel", "parallel", "arbitrary")),
    )(qi_idx, ki_idx, qkv, qkv, qkv)

    # ---- kernel 3: output projection, one fat matmul per tile ------------------------------
    out = pl.pallas_call(
        out_proj_kernel,
        out_shape=jax.ShapeDtypeStruct((B, S, d_out), jnp.float32),
        grid=(n_s, B),
        in_specs=[
            pl.BlockSpec((1, seq_tile, d_out), lambda s, b: (b, s, 0)),
            pl.BlockSpec((d_out, d_out), lambda s, b: (0, 0)),     # resident
        ],
        out_specs=pl.BlockSpec((1, seq_tile, d_out), lambda s, b: (b, s, 0)),
        compiler_params=pltpu.CompilerParams(
            dimension_semantics=("parallel", "parallel")),
    )(ctx, wo_t)
    return out


# -------------------- pure-JAX reference (mirror of the PyTorch module) --------------------

def causal_mha_reference(x, wq, wk, wv, wo, cos_tab, sin_tab, token_positions, n_heads):
    B, S, d_in = x.shape
    d_out = wq.shape[0]
    d_k = d_out // n_heads
    q = x @ wq.T
    k = x @ wk.T
    v = x @ wv.T

    def split(t):
        return t.reshape(B, S, n_heads, d_k).transpose(0, 2, 1, 3)

    q, k, v = split(q), split(k), split(v)
    cos = cos_tab[token_positions]
    sin = sin_tab[token_positions]
    idx = jnp.arange(d_k)
    pair_swaps = idx + jnp.where(idx % 2 == 0, 1, -1)

    def rope(t):
        return t * cos + t[..., pair_swaps] * sin

    q, k = rope(q), rope(k)
    s = jnp.einsum('bhqd,bhkd->bhqk', q, k) / math.sqrt(d_k)
    mask = jnp.tril(jnp.ones((S, S), bool))
    s = jnp.where(mask, s, -jnp.inf)
    p = jax.nn.softmax(s, axis=-1)
    ctx = jnp.einsum('bhqk,bhkd->bhqd', p, v)
    merged = ctx.transpose(0, 2, 1, 3).reshape(B, S, d_out)
    return merged @ wo.T


if __name__ == "__main__":
    # Small, lane-aligned shapes (d_k = 128).  The module requires S <= d_k for
    # its tril(d_k, d_k)[:S, :S] mask buffer to be a full causal mask.
    B, S = 2, 128
    d_in, d_out, n_heads = 128, 256, 2
    d_k = d_out // n_heads
    context_length = 128
    rope_theta = 10000.0

    key = jax.random.PRNGKey(0)
    kx, kq, kk, kv, ko = jax.random.split(key, 5)
    # The module inits weights to zeros; use small random values so the kernels
    # are actually exercised (deterministic via PRNGKey(0)).
    x = jax.random.normal(kx, (B, S, d_in), jnp.float32)
    wq = jax.random.normal(kq, (d_out, d_in), jnp.float32) * 0.1
    wk = jax.random.normal(kk, (d_out, d_in), jnp.float32) * 0.1
    wv = jax.random.normal(kv, (d_out, d_in), jnp.float32) * 0.1
    wo = jax.random.normal(ko, (d_out, d_out), jnp.float32) * 0.1

    cos_tab, sin_tab = make_rope_tables(rope_theta, d_k, context_length)
    token_positions = jnp.arange(S)     # module default

    ref = causal_mha_reference(x, wq, wk, wv, wo, cos_tab, sin_tab,
                               token_positions, n_heads)

    # f32-operand run with 64-tiles: exercises the triangular multi-tile grid
    # (n_q = 2 -> 3 causal tile pairs), the diagonal/interior paths and
    # init/finalize.  Tolerance covers the EUP approximate reciprocal and the
    # online-softmax reassociation.
    out_f32 = causal_mha_pallas(x, wq, wk, wv, wo, cos_tab, sin_tab,
                                token_positions, n_heads,
                                seq_tile=64, q_tile=64, kv_tile=64,
                                compute_dtype=jnp.float32)
    out_f32 = jax.block_until_ready(out_f32)
    assert out_f32.shape == (B, S, d_out)
    assert jnp.allclose(out_f32, ref, atol=2e-2, rtol=2e-2), "f32 kernel mismatch vs reference"

    # Default fast path: bf16 MXU operands (f32 accumulation / softmax / RoPE),
    # 128 tiles.  Looser tolerance accounts for bf16 rounding of all matmul
    # operands vs the all-f32 reference.
    out_bf16 = causal_mha_pallas(x, wq, wk, wv, wo, cos_tab, sin_tab,
                                 token_positions, n_heads)
    out_bf16 = jax.block_until_ready(out_bf16)
    assert out_bf16.shape == (B, S, d_out)
    assert jnp.allclose(out_bf16, ref, atol=2e-1, rtol=2e-1), "bf16 kernel mismatch vs reference"

    print("KERNEL_OK")
</pallas_src>

<mosaic_0001>
module attributes {stable_mosaic.version = 11 : i64} {
  func.func @qkv_rope_kernel(%arg0: i32, %arg1: i32, %arg2: memref<1x64x128xf32, #tpu.memory_space<vmem>>, %arg3: memref<128x768xf32, #tpu.memory_space<vmem>>, %arg4: memref<64x128xf32, #tpu.memory_space<vmem>>, %arg5: memref<64x128xf32, #tpu.memory_space<vmem>>, %arg6: memref<64x128xf32, #tpu.memory_space<vmem>>, %arg7: memref<1x64x768xf32, #tpu.memory_space<vmem>>) attributes {dimension_semantics = [#tpu.dimension_semantics<parallel>, #tpu.dimension_semantics<parallel>], iteration_bounds = array<i64: 2, 2>, scalar_prefetch = 0 : i64, scratch_operands = 0 : i64, tpu.core_type = #tpu.core_type<tc>, window_params = [{transform_indices = @transform_0, window_bounds = array<i64: 1, 64, 128>}, {pipeline_mode = #tpu.pipeline_mode<synchronous>, transform_indices = @transform_1, window_bounds = array<i64: 128, 768>}, {transform_indices = @transform_2, window_bounds = array<i64: 64, 128>}, {transform_indices = @transform_3, window_bounds = array<i64: 64, 128>}, {transform_indices = @transform_4, window_bounds = array<i64: 64, 128>}, {transform_indices = @transform_5, window_bounds = array<i64: 1, 64, 768>}]} {
    %c0 = arith.constant 0 : index
    %c0_0 = arith.constant 0 : index
    %c0_1 = arith.constant 0 : index
    %0 = vector.load %arg2[%c0, %c0_0, %c0_1] : memref<1x64x128xf32, #tpu.memory_space<vmem>>, vector<1x64x128xf32>
    %1 = vector.shape_cast %0 : vector<1x64x128xf32> to vector<64x128xf32>
    %c0_2 = arith.constant 0 : index
    %c0_3 = arith.constant 0 : index
    %2 = vector.load %arg3[%c0_2, %c0_3] : memref<128x768xf32, #tpu.memory_space<vmem>>, vector<128x768xf32>
    %cst = arith.constant dense<0.000000e+00> : vector<64x768xf32>
    %3 = tpu.matmul %1, %2, %cst {dimension_numbers = #tpu.dot_dimension_numbers<[1], [0], [0], [1], [0, 0, 1, 1], [], []>} : vector<64x128xf32>, vector<128x768xf32>, vector<64x768xf32> -> vector<64x768xf32>
    %c0_4 = arith.constant 0 : index
    %c0_5 = arith.constant 0 : index
    %4 = vector.load %arg4[%c0_4, %c0_5] : memref<64x128xf32, #tpu.memory_space<vmem>>, vector<64x128xf32>
    %c0_6 = arith.constant 0 : index
    %c0_7 = arith.constant 0 : index
    %5 = vector.load %arg5[%c0_6, %c0_7] : memref<64x128xf32, #tpu.memory_space<vmem>>, vector<64x128xf32>
    %c0_8 = arith.constant 0 : index
    %c0_9 = arith.constant 0 : index
    %6 = vector.load %arg6[%c0_8, %c0_9] : memref<64x128xf32, #tpu.memory_space<vmem>>, vector<64x128xf32>
    %7 = vector.extract_strided_slice %3 {offsets = [0, 0], sizes = [64, 128], strides = [1, 1]} : vector<64x768xf32> to vector<64x128xf32>
    %c127_i32 = arith.constant 127 : i32
    %8 = tpu.dynamic_rotate %7 by %c127_i32 dim 1 : vector<64x128xf32>, i32 -> vector<64x128xf32>
    %c1_i32 = arith.constant 1 : i32
    %9 = tpu.dynamic_rotate %7 by %c1_i32 dim 1 : vector<64x128xf32>, i32 -> vector<64x128xf32>
    %10 = arith.mulf %7, %4 : vector<64x128xf32>
    %11 = arith.mulf %8, %5 : vector<64x128xf32>
    %12 = arith.addf %10, %11 : vector<64x128xf32>
    %13 = arith.mulf %9, %6 : vector<64x128xf32>
    %14 = arith.addf %12, %13 : vector<64x128xf32>
    %15 = vector.extract_strided_slice %3 {offsets = [0, 128], sizes = [64, 128], strides = [1, 1]} : vector<64x768xf32> to vector<64x128xf32>
    %c127_i32_10 = arith.constant 127 : i32
    %16 = tpu.dynamic_rotate %15 by %c127_i32_10 dim 1 : vector<64x128xf32>, i32 -> vector<64x128xf32>
    %c1_i32_11 = arith.constant 1 : i32
    %17 = tpu.dynamic_rotate %15 by %c1_i32_11 dim 1 : vector<64x128xf32>, i32 -> vector<64x128xf32>
    %18 = arith.mulf %15, %4 : vector<64x128xf32>
    %19 = arith.mulf %16, %5 : vector<64x128xf32>
    %20 = arith.addf %18, %19 : vector<64x128xf32>
    %21 = arith.mulf %17, %6 : vector<64x128xf32>
    %22 = arith.addf %20, %21 : vector<64x128xf32>
    %23 = vector.extract_strided_slice %3 {offsets = [0, 256], sizes = [64, 128], strides = [1, 1]} : vector<64x768xf32> to vector<64x128xf32>
    %c127_i32_12 = arith.constant 127 : i32
    %24 = tpu.dynamic_rotate %23 by %c127_i32_12 dim 1 : vector<64x128xf32>, i32 -> vector<64x128xf32>
    %c1_i32_13 = arith.constant 1 : i32
    %25 = tpu.dynamic_rotate %23 by %c1_i32_13 dim 1 : vector<64x128xf32>, i32 -> vector<64x128xf32>
    %26 = arith.mulf %23, %4 : vector<64x128xf32>
    %27 = arith.mulf %24, %5 : vector<64x128xf32>
    %28 = arith.addf %26, %27 : vector<64x128xf32>
    %29 = arith.mulf %25, %6 : vector<64x128xf32>
    %30 = arith.addf %28, %29 : vector<64x128xf32>
    %31 = vector.extract_strided_slice %3 {offsets = [0, 384], sizes = [64, 128], strides = [1, 1]} : vector<64x768xf32> to vector<64x128xf32>
    %c127_i32_14 = arith.constant 127 : i32
    %32 = tpu.dynamic_rotate %31 by %c127_i32_14 dim 1 : vector<64x128xf32>, i32 -> vector<64x128xf32>
    %c1_i32_15 = arith.constant 1 : i32
    %33 = tpu.dynamic_rotate %31 by %c1_i32_15 dim 1 : vector<64x128xf32>, i32 -> vector<64x128xf32>
    %34 = arith.mulf %31, %4 : vector<64x128xf32>
    %35 = arith.mulf %32, %5 : vector<64x128xf32>
    %36 = arith.addf %34, %35 : vector<64x128xf32>
    %37 = arith.mulf %33, %6 : vector<64x128xf32>
    %38 = arith.addf %36, %37 : vector<64x128xf32>
    %39 = vector.extract_strided_slice %3 {offsets = [0, 512], sizes = [64, 256], strides = [1, 1]} : vector<64x768xf32> to vector<64x256xf32>
    %40 = tpu.concatenate %14, %22, %30, %38, %39 in 1 : vector<64x128xf32>, vector<64x128xf32>, vector<64x128xf32>, vector<64x128xf32>, vector<64x256xf32> -> vector<64x768xf32>
    %c0_16 = arith.constant 0 : index
    %c0_17 = arith.constant 0 : index
    %c0_18 = arith.constant 0 : index
    %41 = vector.load %arg7[%c0_16, %c0_17, %c0_18] : memref<1x64x768xf32, #tpu.memory_space<vmem>>, vector<1x64x768xf32>
    %42 = vector.shape_cast %41 : vector<1x64x768xf32> to vector<64x768xf32>
    %43 = vector.shape_cast %40 : vector<64x768xf32> to vector<1x64x768xf32>
    tpu.vector_store %arg7[%c0_16, %c0_17, %c0_18], %43 {strides = array<i32>} : memref<1x64x768xf32, #tpu.memory_space<vmem>>, vector<1x64x768xf32>,
    return
  }
  func.func @transform_0(%arg0: i32, %arg1: i32) -> (i32, i32, i32) {
    %c0_i32 = arith.constant 0 : i32
    %c0_i32_0 = arith.constant 0 : i32
    return %arg1, %arg0, %c0_i32 : i32, i32, i32
  }
  func.func @transform_1(%arg0: i32, %arg1: i32) -> (i32, i32) {
    %c0_i32 = arith.constant 0 : i32
    %c0_i32_0 = arith.constant 0 : i32
    %c0_i32_1 = arith.constant 0 : i32
    return %c0_i32, %c0_i32_0 : i32, i32
  }
  func.func @transform_2(%arg0: i32, %arg1: i32) -> (i32, i32) {
    %c0_i32 = arith.constant 0 : i32
    %c0_i32_0 = arith.constant 0 : i32
    return %arg0, %c0_i32 : i32, i32
  }
  func.func @transform_3(%arg0: i32, %arg1: i32) -> (i32, i32) {
    %c0_i32 = arith.constant 0 : i32
    %c0_i32_0 = arith.constant 0 : i32
    return %arg0, %c0_i32 : i32, i32
  }
  func.func @transform_4(%arg0: i32, %arg1: i32) -> (i32, i32) {
    %c0_i32 = arith.constant 0 : i32
    %c0_i32_0 = arith.constant 0 : i32
    return %arg0, %c0_i32 : i32, i32
  }
  func.func @transform_5(%arg0: i32, %arg1: i32) -> (i32, i32, i32) {
    %c0_i32 = arith.constant 0 : i32
    %c0_i32_0 = arith.constant 0 : i32
    return %arg1, %arg0, %c0_i32 : i32, i32, i32
  }
}

</mosaic_0001>

<llo_original>
// kernel: tpu_custom_call.1
$region0: #{tpu_custom_call.1}
  #allocation0 [shape = 'u32[]', space=smem, size = 0x4, offset = 0x4, fixed_abs, tag = 'smem constant byte address 0x4 - core index']
  #allocation1 [shape = 'u32[144,128]{1,0:T(1,128)}', space=vmem, size = 0x12000, scoped, tag = 'internal scratch']
  %s0 = inlined_call_operand.hbm [shape: f32[2,128,128], index: 0, kind: input, shape index: {}]
  %s1 = inlined_call_operand.hbm [shape: f32[128,768], index: 1, kind: input, shape index: {}]
  %s2 = inlined_call_operand.hbm [shape: f32[128,128], index: 2, kind: input, shape index: {}]
  %s3 = inlined_call_operand.hbm [shape: f32[128,128], index: 3, kind: input, shape index: {}]
  %s4 = inlined_call_operand.hbm [shape: f32[128,128], index: 4, kind: input, shape index: {}]
  %s5 = inlined_call_operand.hbm [shape: f32[2,128,768], index: 5, kind: output, shape index: {}]
  %s6 = sld [smem:[#allocation0]]
  $region73: #{tpu_custom_call.1} parent=0
    _
  %s8 = ssub.s32 1, %s6
  %s9 = scalar_select 0, %s8, %s6
  $region1: #{tpu_custom_call.1} parent=0
    #allocation2 [shape = 'u8[65536]{0}', space=vmem, size = 0x10000, scoped, tag = 'input window, operand 0']
    #allocation3 [shape = 's32[2]{0}', space=sflag, size = 0x8, scoped, tag = 'scoped memory for tpu_custom_call.1']
    #allocation4 [shape = 's32[2]{0}', space=sflag, size = 0x8, scoped, tag = 'scoped memory for tpu_custom_call.1']
    #allocation5 [shape = 'u8[393216]{0}', space=vmem, size = 0x60000, scoped, tag = 'input window, operand 1, single buffered']
    #allocation6 [shape = 's32[1]{0}', space=sflag, size = 0x4, scoped, tag = 'scoped memory for tpu_custom_call.1']
    #allocation7 [shape = 'u8[65536]{0}', space=vmem, size = 0x10000, scoped, tag = 'input window, operand 2']
    #allocation8 [shape = 'u8[65536]{0}', space=vmem, size = 0x10000, scoped, tag = 'input window, operand 3']
    #allocation9 [shape = 'u8[65536]{0}', space=vmem, size = 0x10000, scoped, tag = 'input window, operand 4']
    #allocation10 [shape = 'u8[393216]{0}', space=vmem, size = 0x60000, scoped, tag = 'output window, operand 0']
    %10 = vsyncpa [#allocation3], 0
    %s11 = scalar_lea.sflag [#allocation3], 1
    %12 = vsyncpa %s11, 0
    %13 = vsyncpa [#allocation6], 0
    %14 = vsyncpa [#allocation4], 0
    %s15 = scalar_lea.sflag [#allocation4], 1
    %16 = vsyncpa %s15, 0
    loop: start=0, step=1, limit=6
    $region2: #{tpu_custom_call.1} parent=1 // loop_pre_header
      _
    $region3: #{tpu_custom_call.1} parent=1 // loop_header
      %s18 = sphi 0, %s22
      %p19 = scmp.ge.s32.totalorder %s18, 6
      %s25 = sphi 0, %s37
      %s26 = sphi 0, %s33
      %s27 = sphi 0, %s25
      %s28 = sphi 0, %s26
      %s29 = sphi 0, %s27
      %s30 = sphi 0, %s28
      %s42 = sphi 0, %s44
      %s45 = sphi 0, %s42
      %s46 = sphi 0, %s45
      %s62 = sphi 0, %s46
      %s66 = sphi 0, %s66
      %s68 = sphi 0, %s66
      %s69 = sphi 0, %s68
      %s83 = sphi 0, %s69
      %s89 = sphi 0, %s91
      %s92 = sphi 0, %s89
      %s93 = sphi 0, %s92
      %s109 = sphi 0, %s93
      %s115 = sphi 0, %s117
      %s118 = sphi 0, %s115
      %s119 = sphi 0, %s118
      %s135 = sphi 0, %s119
      %s141 = sphi 0, %s143
      %s144 = sphi 0, %s141
      %s145 = sphi 0, %s144
      %s161 = sphi 0, %s145
      %s169 = sphi 0, %s171
      %s172 = sphi 0, %s169
      %s173 = sphi 0, %s172
      %s189 = sphi 0, %s173
    $region4: #{tpu_custom_call.1} parent=1 // loop_header_branch
      %21 = sbr.rel (%p19) target = $region8
    $region5: #{tpu_custom_call.1} parent=1 // loop_body
      %s23 = ssub.s32 %s18, 1
      %s24 = ssub.s32 %s18, 2
      %s31 = sadd.s32 1, %s26
      %p32 = scmp.ge.s32.totalorder %s31, 2
      %s33 = scalar_select %p32, 0, %s31
      %s34 = sadd.s32 1, %s25
      %s35 = scalar_select %p32, %s34, %s25
      %p36 = scmp.ge.s32.totalorder %s35, 2
      %s37 = scalar_select %p36, 0, %s35
      %s38 = ssub.s32 %s26, %s33
      %s39 = ssub.s32 %s25, %s37
      %s40 = sor.u32 %s38, %s39
      %p41 = scmp.eq.s32.totalorder %s40, 0
      %s43 = sadd.s32 %s42, 1
      %s44 = scalar_select %p41, %s42, %s43
      %p47 = pneg %p41
      %p48 = scmp.eq.s32.totalorder %s18, 3
      %p49 = por %p47, %p48
      %p50 = scmp.ne.s32.totalorder %s42, %s45
      %p51 = scmp.eq.s32.totalorder %s18, 0
      %p52 = por %p50, %p51
      %p53 = scmp.ne.s32.totalorder %s42, %s45
      %p54 = scmp.eq.s32.totalorder %s23, 3
      %p55 = por %p53, %p54
      %p56 = scmp.ne.s32.totalorder %s45, %s46
      %p57 = scmp.eq.s32.totalorder %s23, 0
      %p58 = por %p56, %p57
      %p59 = scmp.ne.s32.totalorder %s45, %s46
      %p60 = scmp.eq.s32.totalorder %s24, 3
      %p61 = por %p59, %p60
      %p63 = scmp.ne.s32.totalorder %s46, %s62
      %p64 = scmp.eq.s32.totalorder %s24, 0
      %p65 = por %p63, %p64
      %s67 = sadd.s32 %s66, 1
      %p70 = scmp.eq.s32.totalorder %s18, 3
      %p71 = scmp.ne.s32.totalorder %s66, %s68
      %p72 = scmp.eq.s32.totalorder %s18, 0
      %p73 = por %p71, %p72
      %p74 = scmp.ne.s32.totalorder %s66, %s68
      %p75 = scmp.eq.s32.totalorder %s23, 3
      %p76 = por %p74, %p75
      %p77 = scmp.ne.s32.totalorder %s68, %s69
      %p78 = scmp.eq.s32.totalorder %s23, 0
      %p79 = por %p77, %p78
      %p80 = scmp.ne.s32.totalorder %s68, %s69
      %p81 = scmp.eq.s32.totalorder %s24, 3
      %p82 = por %p80, %p81
      %p84 = scmp.ne.s32.totalorder %s69, %s83
      %p85 = scmp.eq.s32.totalorder %s24, 0
      %p86 = por %p84, %p85
      %s87 = ssub.s32 %s25, %s37
      %p88 = scmp.eq.s32.totalorder %s87, 0
      %s90 = sadd.s32 %s89, 1
      %s91 = scalar_select %p88, %s89, %s90
      %p94 = pneg %p88
      %p95 = scmp.eq.s32.totalorder %s18, 3
      %p96 = por %p94, %p95
      %p97 = scmp.ne.s32.totalorder %s89, %s92
      %p98 = scmp.eq.s32.totalorder %s18, 0
      %p99 = por %p97, %p98
      %p100 = scmp.ne.s32.totalorder %s89, %s92
      %p101 = scmp.eq.s32.totalorder %s23, 3
      %p102 = por %p100, %p101
      %p103 = scmp.ne.s32.totalorder %s92, %s93
      %p104 = scmp.eq.s32.totalorder %s23, 0
      %p105 = por %p103, %p104
      %p106 = scmp.ne.s32.totalorder %s92, %s93
      %p107 = scmp.eq.s32.totalorder %s24, 3
      %p108 = por %p106, %p107
      %p110 = scmp.ne.s32.totalorder %s93, %s109
      %p111 = scmp.eq.s32.totalorder %s24, 0
      %p112 = por %p110, %p111
      %s113 = ssub.s32 %s25, %s37
      %p114 = scmp.eq.s32.totalorder %s113, 0
      %s116 = sadd.s32 %s115, 1
      %s117 = scalar_select %p114, %s115, %s116
      %p120 = pneg %p114
      %p121 = scmp.eq.s32.totalorder %s18, 3
      %p122 = por %p120, %p121
      %p123 = scmp.ne.s32.totalorder %s115, %s118
      %p124 = scmp.eq.s32.totalorder %s18, 0
      %p125 = por %p123, %p124
      %p126 = scmp.ne.s32.totalorder %s115, %s118
      %p127 = scmp.eq.s32.totalorder %s23, 3
      %p128 = por %p126, %p127
      %p129 = scmp.ne.s32.totalorder %s118, %s119
      %p130 = scmp.eq.s32.totalorder %s23, 0
      %p131 = por %p129, %p130
      %p132 = scmp.ne.s32.totalorder %s118, %s119
      %p133 = scmp.eq.s32.totalorder %s24, 3
      %p134 = por %p132, %p133
      %p136 = scmp.ne.s32.totalorder %s119, %s135
      %p137 = scmp.eq.s32.totalorder %s24, 0
      %p138 = por %p136, %p137
      %s139 = ssub.s32 %s25, %s37
      %p140 = scmp.eq.s32.totalorder %s139, 0
      %s142 = sadd.s32 %s141, 1
      %s143 = scalar_select %p140, %s141, %s142
      %p146 = pneg %p140
      %p147 = scmp.eq.s32.totalorder %s18, 3
      %p148 = por %p146, %p147
      %p149 = scmp.ne.s32.totalorder %s141, %s144
      %p150 = scmp.eq.s32.totalorder %s18, 0
      %p151 = por %p149, %p150
      %p152 = scmp.ne.s32.totalorder %s141, %s144
      %p153 = scmp.eq.s32.totalorder %s23, 3
      %p154 = por %p152, %p153
      %p155 = scmp.ne.s32.totalorder %s144, %s145
      %p156 = scmp.eq.s32.totalorder %s23, 0
      %p157 = por %p155, %p156
      %p158 = scmp.ne.s32.totalorder %s144, %s145
      %p159 = scmp.eq.s32.totalorder %s24, 3
      %p160 = por %p158, %p159
      %p162 = scmp.ne.s32.totalorder %s145, %s161
      %p163 = scmp.eq.s32.totalorder %s24, 0
      %p164 = por %p162, %p163
      %s165 = ssub.s32 %s26, %s33
      %s166 = ssub.s32 %s25, %s37
      %s167 = sor.u32 %s165, %s166
      %p168 = scmp.eq.s32.totalorder %s167, 0
      %s170 = sadd.s32 %s169, 1
      %s171 = scalar_select %p168, %s169, %s170
      %p174 = pneg %p168
      %p175 = scmp.eq.s32.totalorder %s18, 3
      %p176 = por %p174, %p175
      %p177 = scmp.ne.s32.totalorder %s169, %s172
      %p178 = scmp.eq.s32.totalorder %s18, 0
      %p179 = por %p177, %p178
      %p180 = scmp.ne.s32.totalorder %s169, %s172
      %p181 = scmp.eq.s32.totalorder %s23, 3
      %p182 = por %p180, %p181
      %p183 = scmp.ne.s32.totalorder %s172, %s173
      %p184 = scmp.eq.s32.totalorder %s23, 0
      %p185 = por %p183, %p184
      %p186 = scmp.ne.s32.totalorder %s172, %s173
      %p187 = scmp.eq.s32.totalorder %s24, 3
      %p188 = por %p186, %p187
      %p190 = scmp.ne.s32.totalorder %s173, %s189
      %p191 = scmp.eq.s32.totalorder %s24, 0
      %p192 = por %p190, %p191
      %p193 = scmp.le.s32.totalorder 1, %s18
      %p194 = scmp.lt.s32.totalorder %s18, 5
      %p195 = pnand %p193, %p194
      %p196 = pneg %p195
      // Predicated region
      $region9: #{tpu_custom_call.1} parent=5 // pred_check
        _
      $region10: #{tpu_custom_call.1} parent=5 // pred_check_branch
        %198 = sbr.rel (%p195) target = $region12
      $region11: #{tpu_custom_call.1} parent=5 // pred_region
        %s199 = ssub.s32 %s18, 1
        // Predicated region
        $region13: #{tpu_custom_call.1} parent=11 // pred_check
          %p200 = pneg %p79
        $region14: #{tpu_custom_call.1} parent=11 // pred_check_branch
          %202 = sbr.rel (%p200) target = $region16
        $region15: #{tpu_custom_call.1} parent=11 // pred_region
          %s204 = ssub.s32 12288, 12288
          %205 = vsyncadd [#allocation6], %s204
          %s206 = sshll.u32 [#allocation5], 4
          %s207 = int_to_ptr.vmem [resolvable:$true] %s206
          %212 = dma.hbm_to_vmem [thread:$0]  %s1, 12288, %s207, [#allocation6], 768, 768, 48
        $region16: #{tpu_custom_call.1} parent=11 // pred_fallthru
          _
      $region12: #{tpu_custom_call.1} parent=5 // pred_fallthru
        _
      %p213 = scmp.lt.s32.totalorder %s18, 4
      // Predicated region
      $region17: #{tpu_custom_call.1} parent=5 // pred_check
        %p214 = pneg %p213
      $region18: #{tpu_custom_call.1} parent=5 // pred_check_branch
        %216 = sbr.rel (%p214) target = $region20
      $region19: #{tpu_custom_call.1} parent=5 // pred_region
        // Predicated region
        $region21: #{tpu_custom_call.1} parent=19 // pred_check
          %p217 = pneg %p52
        $region22: #{tpu_custom_call.1} parent=19 // pred_check_branch
          %219 = sbr.rel (%p217) target = $region24
        $region23: #{tpu_custom_call.1} parent=19 // pred_region
          %s220 = sand.u32 %s18, 1
          %s221 = scalar_lea.sflag [#allocation3], %s220
          %s222 = sand.u32 %s42, 1
          %s223 = smul.addr %s222, 64
          %s224 = scalar_lea.vmem [#allocation2], %s223
          %s225 = smul.u32 8, %s25
          %s227 = ssub.s32 1024, 1024
          %228 = vsyncadd %s221, %s227
          %s229 = smul.addr %s26, 16
          %s230 = sadd.s32 %s225, %s229
          %s231 = smul.addr %s230, 128
          %s232 = scalar_lea.hbm %s0, %s231
          %s233 = sshll.u32 %s224, 4
          %s234 = int_to_ptr.vmem [resolvable:$true] %s233
          %239 = dma.hbm_to_vmem [thread:$0]  %s232, 1024, %s234, %s221, 128, 128, 8
        $region24: #{tpu_custom_call.1} parent=19 // pred_fallthru
          _
        // Predicated region
        $region25: #{tpu_custom_call.1} parent=19 // pred_check
          %p240 = pneg %p99
        $region26: #{tpu_custom_call.1} parent=19 // pred_check_branch
          %242 = sbr.rel (%p240) target = $region28
        $region27: #{tpu_custom_call.1} parent=19 // pred_region
          %s243 = sand.u32 %s18, 1
          %s244 = scalar_lea.sflag [#allocation3], %s243
          %s245 = sand.u32 %s89, 1
          %s246 = smul.addr %s245, 64
          %s247 = scalar_lea.vmem [#allocation7], %s246
          %s248 = smul.u32 8, %s25
          %s250 = ssub.s32 1024, 1024
          %251 = vsyncadd %s244, %s250
          %s252 = smul.addr %s248, 128
          %s253 = scalar_lea.hbm %s2, %s252
          %s254 = sshll.u32 %s247, 4
          %s255 = int_to_ptr.vmem [resolvable:$true] %s254
          %260 = dma.hbm_to_vmem [thread:$0]  %s253, 1024, %s255, %s244, 128, 128, 8
        $region28: #{tpu_custom_call.1} parent=19 // pred_fallthru
          _
        // Predicated region
        $region29: #{tpu_custom_call.1} parent=19 // pred_check
          %p261 = pneg %p125
        $region30: #{tpu_custom_call.1} parent=19 // pred_check_branch
          %263 = sbr.rel (%p261) target = $region32
        $region31: #{tpu_custom_call.1} parent=19 // pred_region
          %s264 = sand.u32 %s18, 1
          %s265 = scalar_lea.sflag [#allocation3], %s264
          %s266 = sand.u32 %s115, 1
          %s267 = smul.addr %s266, 64
          %s268 = scalar_lea.vmem [#allocation8], %s267
          %s269 = smul.u32 8, %s25
          %s271 = ssub.s32 1024, 1024
          %272 = vsyncadd %s265, %s271
          %s273 = smul.addr %s269, 128
          %s274 = scalar_lea.hbm %s3, %s273
          %s275 = sshll.u32 %s268, 4
          %s276 = int_to_ptr.vmem [resolvable:$true] %s275
          %281 = dma.hbm_to_vmem [thread:$0]  %s274, 1024, %s276, %s265, 128, 128, 8
        $region32: #{tpu_custom_call.1} parent=19 // pred_fallthru
          _
        // Predicated region
        $region33: #{tpu_custom_call.1} parent=19 // pred_check
          %p282 = pneg %p151
        $region34: #{tpu_custom_call.1} parent=19 // pred_check_branch
          %284 = sbr.rel (%p282) target = $region36
        $region35: #{tpu_custom_call.1} parent=19 // pred_region
          %s285 = sand.u32 %s18, 1
          %s286 = scalar_lea.sflag [#allocation3], %s285
          %s287 = sand.u32 %s141, 1
          %s288 = smul.addr %s287, 64
          %s289 = scalar_lea.vmem [#allocation9], %s288
          %s290 = smul.u32 8, %s25
          %s292 = ssub.s32 1024, 1024
          %293 = vsyncadd %s286, %s292
          %s294 = smul.addr %s290, 128
          %s295 = scalar_lea.hbm %s4, %s294
          %s296 = sshll.u32 %s289, 4
          %s297 = int_to_ptr.vmem [resolvable:$true] %s296
          %302 = dma.hbm_to_vmem [thread:$0]  %s295, 1024, %s297, %s286, 128, 128, 8
        $region36: #{tpu_custom_call.1} parent=19 // pred_fallthru
          _
      $region20: #{tpu_custom_call.1} parent=5 // pred_fallthru
        _
      %p303 = scmp.le.s32.totalorder 1, %s18
      %p304 = scmp.lt.s32.totalorder %s18, 5
      %p305 = pnand %p303, %p304
      %p306 = pneg %p305
      // Predicated region
      $region37: #{tpu_custom_call.1} parent=5 // pred_check
        _
      $region38: #{tpu_custom_call.1} parent=5 // pred_check_branch
        %308 = sbr.rel (%p305) target = $region40
      $region39: #{tpu_custom_call.1} parent=5 // pred_region
        %s309 = ssub.s32 %s18, 1
        %s310 = sand.u32 %s23, 1
        %s311 = scalar_lea.sflag [#allocation3], %s310
        %s312 = sand.u32 %s45, 1
        %s313 = smul.addr %s312, 64
        %s314 = scalar_lea.vmem [#allocation2], %s313
        // Predicated region
        $region41: #{tpu_custom_call.1} parent=39 // pred_check
          %p315 = pneg %p58
        $region42: #{tpu_custom_call.1} parent=39 // pred_check_branch
          %317 = sbr.rel (%p315) target = $region44
        $region43: #{tpu_custom_call.1} parent=39 // pred_region
          %318 = dma.done %s311, 1024
        $region44: #{tpu_custom_call.1} parent=39 // pred_fallthru
          _
        // Predicated region
        $region45: #{tpu_custom_call.1} parent=39 // pred_check
          %p319 = pneg %p79
        $region46: #{tpu_custom_call.1} parent=39 // pred_check_branch
          %321 = sbr.rel (%p319) target = $region48
        $region47: #{tpu_custom_call.1} parent=39 // pred_region
          %322 = dma.done [#allocation6], 12288
        $region48: #{tpu_custom_call.1} parent=39 // pred_fallthru
          _
        %s323 = sand.u32 %s23, 1
        %s324 = scalar_lea.sflag [#allocation3], %s323
        %s325 = sand.u32 %s92, 1
        %s326 = smul.addr %s325, 64
        %s327 = scalar_lea.vmem [#allocation7], %s326
        // Predicated region
        $region49: #{tpu_custom_call.1} parent=39 // pred_check
          %p328 = pneg %p105
        $region50: #{tpu_custom_call.1} parent=39 // pred_check_branch
          %330 = sbr.rel (%p328) target = $region52
        $region51: #{tpu_custom_call.1} parent=39 // pred_region
          %331 = dma.done %s324, 1024
        $region52: #{tpu_custom_call.1} parent=39 // pred_fallthru
          _
        %s332 = sand.u32 %s23, 1
        %s333 = scalar_lea.sflag [#allocation3], %s332
        %s334 = sand.u32 %s118, 1
        %s335 = smul.addr %s334, 64
        %s336 = scalar_lea.vmem [#allocation8], %s335
        // Predicated region
        $region53: #{tpu_custom_call.1} parent=39 // pred_check
          %p337 = pneg %p131
        $region54: #{tpu_custom_call.1} parent=39 // pred_check_branch
          %339 = sbr.rel (%p337) target = $region56
        $region55: #{tpu_custom_call.1} parent=39 // pred_region
          %340 = dma.done %s333, 1024
        $region56: #{tpu_custom_call.1} parent=39 // pred_fallthru
          _
        %s341 = sand.u32 %s23, 1
        %s342 = scalar_lea.sflag [#allocation3], %s341
        %s343 = sand.u32 %s144, 1
        %s344 = smul.addr %s343, 64
        %s345 = scalar_lea.vmem [#allocation9], %s344
        // Predicated region
        $region57: #{tpu_custom_call.1} parent=39 // pred_check
          %p346 = pneg %p157
        $region58: #{tpu_custom_call.1} parent=39 // pred_check_branch
          %348 = sbr.rel (%p346) target = $region60
        $region59: #{tpu_custom_call.1} parent=39 // pred_region
          %349 = dma.done %s342, 1024
        $region60: #{tpu_custom_call.1} parent=39 // pred_fallthru
          _
        %s350 = sand.u32 %s23, 1
        %s351 = scalar_lea.sflag [#allocation3], %s350
        %s352 = sand.u32 %s45, 1
        %s353 = smul.addr %s352, 64
        %s354 = scalar_lea.vmem [#allocation2], %s353
        %p355 = pneg %p58
        %p356 = pneg %p55
        %p357 = pneg %p79
        %p358 = pneg %p76
        %s359 = sand.u32 %s23, 1
        %s360 = scalar_lea.sflag [#allocation3], %s359
        %s361 = sand.u32 %s92, 1
        %s362 = smul.addr %s361, 64
        %s363 = scalar_lea.vmem [#allocation7], %s362
        %p364 = pneg %p105
        %p365 = pneg %p102
        %s366 = sand.u32 %s23, 1
        %s367 = scalar_lea.sflag [#allocation3], %s366
        %s368 = sand.u32 %s118, 1
        %s369 = smul.addr %s368, 64
        %s370 = scalar_lea.vmem [#allocation8], %s369
        %p371 = pneg %p131
        %p372 = pneg %p128
        %s373 = sand.u32 %s23, 1
        %s374 = scalar_lea.sflag [#allocation3], %s373
        %s375 = sand.u32 %s144, 1
        %s376 = smul.addr %s375, 64
        %s377 = scalar_lea.vmem [#allocation9], %s376
        %p378 = pneg %p157
        %p379 = pneg %p154
        %p380 = pneg %p185
        %p381 = pneg %p182
        %s382 = sand.u32 %s172, 1
        %s383 = scalar_lea.sflag [#allocation4], %s382
        %s384 = sand.u32 %s172, 1
        %s385 = smul.addr %s384, 384
        %s386 = scalar_lea.vmem [#allocation10], %s385
        %s387 = smul.u32 8, %s27
        %s388 = smul.u32 8, %s27
        %s389 = smul.u32 8, %s27
        %s390 = smul.u32 8, %s27
        %s391 = smul.u32 8, %s27
        %v392 = vld [vmem:[%s314] sm:$0xff]
        %v393 = vld [vmem:[%s314 + $0x8] sm:$0xff]
        %v394 = vld [vmem:[%s314 + $0x10] sm:$0xff]
        %v395 = vld [vmem:[%s314 + $0x18] sm:$0xff]
        %v396 = vld [vmem:[%s314 + $0x20] sm:$0xff]
        %v397 = vld [vmem:[%s314 + $0x28] sm:$0xff]
        %v398 = vld [vmem:[%s314 + $0x30] sm:$0xff]
        %v399 = vld [vmem:[%s314 + $0x38] sm:$0xff]
        %v400 = vld [vmem:[#allocation5] sm:$0xff]
        %v401 = vld [vmem:[#allocation5 + $0x8] sm:$0xff]
        %v402 = vld [vmem:[#allocation5 + $0x10] sm:$0xff]
        %v403 = vld [vmem:[#allocation5 + $0x18] sm:$0xff]
        %v404 = vld [vmem:[#allocation5 + $0x20] sm:$0xff]
        %v405 = vld [vmem:[#allocation5 + $0x28] sm:$0xff]
        %v406 = vld [vmem:[#allocation5 + $0x30] sm:$0xff]
        %v407 = vld [vmem:[#allocation5 + $0x38] sm:$0xff]
        %v408 = vld [vmem:[#allocation5 + $0x40] sm:$0xff]
        %v409 = vld [vmem:[#allocation5 + $0x48] sm:$0xff]
        %v410 = vld [vmem:[#allocation5 + $0x50] sm:$0xff]
        %v411 = vld [vmem:[#allocation5 + $0x58] sm:$0xff]
        %v412 = vld [vmem:[#allocation5 + $0x60] sm:$0xff]
        %v413 = vld [vmem:[#allocation5 + $0x68] sm:$0xff]
        %v414 = vld [vmem:[#allocation5 + $0x70] sm:$0xff]
        %v415 = vld [vmem:[#allocation5 + $0x78] sm:$0xff]
        %v416 = vld [vmem:[#allocation5 + $0x80] sm:$0xff]
        %v417 = vld [vmem:[#allocation5 + $0x88] sm:$0xff]
        %v418 = vld [vmem:[#allocation5 + $0x90] sm:$0xff]
        %v419 = vld [vmem:[#allocation5 + $0x98] sm:$0xff]
        %v420 = vld [vmem:[#allocation5 + $0xa0] sm:$0xff]
        %v421 = vld [vmem:[#allocation5 + $0xa8] sm:$0xff]
        %v422 = vld [vmem:[#allocation5 + $0xb0] sm:$0xff]
        %v423 = vld [vmem:[#allocation5 + $0xb8] sm:$0xff]
        %v424 = vld [vmem:[#allocation5 + $0xc0] sm:$0xff]
        %v425 = vld [vmem:[#allocation5 + $0xc8] sm:$0xff]
        %v426 = vld [vmem:[#allocation5 + $0xd0] sm:$0xff]
        %v427 = vld [vmem:[#allocation5 + $0xd8] sm:$0xff]
        %v428 = vld [vmem:[#allocation5 + $0xe0] sm:$0xff]
        %v429 = vld [vmem:[#allocation5 + $0xe8] sm:$0xff]
        %v430 = vld [vmem:[#allocation5 + $0xf0] sm:$0xff]
        %v431 = vld [vmem:[#allocation5 + $0xf8] sm:$0xff]
        %v432 = vld [vmem:[#allocation5 + $0x100] sm:$0xff]
        %v433 = vld [vmem:[#allocation5 + $0x108] sm:$0xff]
        %v434 = vld [vmem:[#allocation5 + $0x110] sm:$0xff]
        %v435 = vld [vmem:[#allocation5 + $0x118] sm:$0xff]
        %v436 = vld [vmem:[#allocation5 + $0x120] sm:$0xff]
        %v437 = vld [vmem:[#allocation5 + $0x128] sm:$0xff]
        %v438 = vld [vmem:[#allocation5 + $0x130] sm:$0xff]
        %v439 = vld [vmem:[#allocation5 + $0x138] sm:$0xff]
        %v440 = vld [vmem:[#allocation5 + $0x140] sm:$0xff]
        %v441 = vld [vmem:[#allocation5 + $0x148] sm:$0xff]
        %v442 = vld [vmem:[#allocation5 + $0x150] sm:$0xff]
        %v443 = vld [vmem:[#allocation5 + $0x158] sm:$0xff]
        %v444 = vld [vmem:[#allocation5 + $0x160] sm:$0xff]
        %v445 = vld [vmem:[#allocation5 + $0x168] sm:$0xff]
        %v446 = vld [vmem:[#allocation5 + $0x170] sm:$0xff]
        %v447 = vld [vmem:[#allocation5 + $0x178] sm:$0xff]
        %v448 = vld [vmem:[#allocation5 + $0x180] sm:$0xff]
        %v449 = vld [vmem:[#allocation5 + $0x188] sm:$0xff]
        %v450 = vld [vmem:[#allocation5 + $0x190] sm:$0xff]
        %v451 = vld [vmem:[#allocation5 + $0x198] sm:$0xff]
        %v452 = vld [vmem:[#allocation5 + $0x1a0] sm:$0xff]
        %v453 = vld [vmem:[#allocation5 + $0x1a8] sm:$0xff]
        %v454 = vld [vmem:[#allocation5 + $0x1b0] sm:$0xff]
        %v455 = vld [vmem:[#allocation5 + $0x1b8] sm:$0xff]
        %v456 = vld [vmem:[#allocation5 + $0x1c0] sm:$0xff]
        %v457 = vld [vmem:[#allocation5 + $0x1c8] sm:$0xff]
        %v458 = vld [vmem:[#allocation5 + $0x1d0] sm:$0xff]
        %v459 = vld [vmem:[#allocation5 + $0x1d8] sm:$0xff]
        %v460 = vld [vmem:[#allocation5 + $0x1e0] sm:$0xff]
        %v461 = vld [vmem:[#allocation5 + $0x1e8] sm:$0xff]
        %v462 = vld [vmem:[#allocation5 + $0x1f0] sm:$0xff]
        %v463 = vld [vmem:[#allocation5 + $0x1f8] sm:$0xff]
        %v464 = vld [vmem:[#allocation5 + $0x200] sm:$0xff]
        %v465 = vld [vmem:[#allocation5 + $0x208] sm:$0xff]
        %v466 = vld [vmem:[#allocation5 + $0x210] sm:$0xff]
        %v467 = vld [vmem:[#allocation5 + $0x218] sm:$0xff]
        %v468 = vld [vmem:[#allocation5 + $0x220] sm:$0xff]
        %v469 = vld [vmem:[#allocation5 + $0x228] sm:$0xff]
        %v470 = vld [vmem:[#allocation5 + $0x230] sm:$0xff]
        %v471 = vld [vmem:[#allocation5 + $0x238] sm:$0xff]
        %v472 = vld [vmem:[#allocation5 + $0x240] sm:$0xff]
        %v473 = vld [vmem:[#allocation5 + $0x248] sm:$0xff]
        %v474 = vld [vmem:[#allocation5 + $0x250] sm:$0xff]
        %v475 = vld [vmem:[#allocation5 + $0x258] sm:$0xff]
        %v476 = vld [vmem:[#allocation5 + $0x260] sm:$0xff]
        %v477 = vld [vmem:[#allocation5 + $0x268] sm:$0xff]
        %v478 = vld [vmem:[#allocation5 + $0x270] sm:$0xff]
        %v479 = vld [vmem:[#allocation5 + $0x278] sm:$0xff]
        %v480 = vld [vmem:[#allocation5 + $0x280] sm:$0xff]
        %v481 = vld [vmem:[#allocation5 + $0x288] sm:$0xff]
        %v482 = vld [vmem:[#allocation5 + $0x290] sm:$0xff]
        %v483 = vld [vmem:[#allocation5 + $0x298] sm:$0xff]
        %v484 = vld [vmem:[#allocation5 + $0x2a0] sm:$0xff]
        %v485 = vld [vmem:[#allocation5 + $0x2a8] sm:$0xff]
        %v486 = vld [vmem:[#allocation5 + $0x2b0] sm:$0xff]
        %v487 = vld [vmem:[#allocation5 + $0x2b8] sm:$0xff]
        %v488 = vld [vmem:[#allocation5 + $0x2c0] sm:$0xff]
        %v489 = vld [vmem:[#allocation5 + $0x2c8] sm:$0xff]
        %v490 = vld [vmem:[#allocation5 + $0x2d0] sm:$0xff]
        %v491 = vld [vmem:[#allocation5 + $0x2d8] sm:$0xff]
        %v492 = vld [vmem:[#allocation5 + $0x2e0] sm:$0xff]
        %v493 = vld [vmem:[#allocation5 + $0x2e8] sm:$0xff]
        %v494 = vld [vmem:[#allocation5 + $0x2f0] sm:$0xff]
        %v495 = vld [vmem:[#allocation5 + $0x2f8] sm:$0xff]
        %496 = vmatprep.subr.mxu0 %v401
        %497 = vmatpush1.msra.mxu0 %v400
        %498 = vmatprep.subr.mxu0 %v407
        %499 = vmatpush1.msra.mxu0 %v406
        %500 = vmatprep.subr.mxu0 %v413
        %501 = vmatpush1.msra.mxu0 %v412
        %502 = vmatprep.subr.mxu0 %v419
        %503 = vmatpush1.msra.mxu0 %v418
        %504 = vmatprep.subr.mxu0 %v425
        %505 = vmatpush1.msra.mxu0 %v424
        %506 = vmatprep.subr.mxu0 %v431
        %507 = vmatpush1.msra.mxu0 %v430
        %508 = vmatprep.subr.mxu0 %v437
        %509 = vmatpush1.msra.mxu0 %v436
        %510 = vmatprep.subr.mxu0 %v443
        %511 = vmatpush1.msra.mxu0 %v442
        %512 = vmatprep.subr.mxu0 %v449
        %513 = vmatpush1.msra.mxu0 %v448
        %514 = vmatprep.subr.mxu0 %v455
        %515 = vmatpush1.msra.mxu0 %v454
        %516 = vmatprep.subr.mxu0 %v461
        %517 = vmatpush1.msra.mxu0 %v460
        %518 = vmatprep.subr.mxu0 %v467
        %519 = vmatpush1.msra.mxu0 %v466
        %520 = vmatprep.subr.mxu0 %v473
        %521 = vmatpush1.msra.mxu0 %v472
        %522 = vmatprep.subr.mxu0 %v479
        %523 = vmatpush1.msra.mxu0 %v478
        %524 = vmatprep.subr.mxu0 %v485
        %525 = vmatpush1.msra.mxu0 %v484
        %526 = vmatprep.subr.mxu0 %v491
        %527 = vmatpush1.msra.mxu0 %v490
        %528 = vmatprep.subr.mxu0 0.0
        %529 = vmatpush1.msra.mxu0 0.0
        %530 = vmatprep.subr.mxu0 0.0
        %531 = vmatpush1.msra.mxu0 0.0
        %532 = vmatprep.subr.mxu0 0.0
        %533 = vmatpush1.msra.mxu0 0.0
        %534 = vmatprep.subr.mxu0 0.0
        %535 = vmatpush1.msra.mxu0 0.0
        %536 = vmatprep.subr.mxu0 0.0
        %537 = vmatpush1.msra.mxu0 0.0
        %538 = vmatprep.subr.mxu0 0.0
        %539 = vmatpush1.msra.mxu0 0.0
        %540 = vmatprep.subr.mxu0 0.0
        %541 = vmatpush1.msra.mxu0 0.0
        %542 = vmatprep.subr.mxu0 0.0
        %543 = vmatpush1.msra.mxu0 0.0
        %544 = vmatprep.subr.mxu0 0.0
        %545 = vmatpush1.msra.mxu0 0.0
        %546 = vmatprep.subr.mxu0 0.0
        %547 = vmatpush1.msra.mxu0 0.0
        %548 = vmatprep.subr.mxu0 0.0
        %549 = vmatpush1.msra.mxu0 0.0
        %550 = vmatprep.subr.mxu0 0.0
        %551 = vmatpush1.msra.mxu0 0.0
        %552 = vmatprep.subr.mxu0 0.0
        %553 = vmatpush1.msra.mxu0 0.0
        %554 = vmatprep.subr.mxu0 0.0
        %555 = vmatpush1.msra.mxu0 0.0
        %556 = vmatprep.subr.mxu0 0.0
        %557 = vmatpush1.msra.mxu0 0.0
        %558 = vmatprep.subr.mxu0 0.0
        %559 = vmatpush1.msra.mxu0 0.0
        %560 = vmatprep.mubr.f32.mxu0 0.0
        %561 = vmatmul.mubr.f32.gmra.mrb[0].mxu0 %v392
        %v562 = vpop.f32.mrb[0].mxu0
        %v563 = vadd.f32 0.0, %v562
        %v564 = vpop.f32.mrb[0].mxu0
        %v565 = vadd.f32 0.0, %v564
        %566 = vmatprep.mubr.f32.mxu0 0.0
        %567 = vmatmul.mubr.f32.gmra.mrb[0].mxu0 %v393
        %v568 = vpop.f32.mrb[0].mxu0
        %v569 = vadd.f32 0.0, %v568
        %v570 = vpop.f32.mrb[0].mxu0
        %v571 = vadd.f32 0.0, %v570
        %572 = vmatprep.mubr.f32.mxu0 0.0
        %573 = vmatmul.mubr.f32.gmra.mrb[0].mxu0 %v394
        %v574 = vpop.f32.mrb[0].mxu0
        %v575 = vadd.f32 0.0, %v574
        %v576 = vpop.f32.mrb[0].mxu0
        %v577 = vadd.f32 0.0, %v576
        %578 = vmatprep.mubr.f32.mxu0 0.0
        %579 = vmatmul.mubr.f32.gmra.mrb[0].mxu0 %v395
        %v580 = vpop.f32.mrb[0].mxu0
        %v581 = vadd.f32 0.0, %v580
        %v582 = vpop.f32.mrb[0].mxu0
        %v583 = vadd.f32 0.0, %v582
        %584 = vmatprep.mubr.f32.mxu0 0.0
        %585 = vmatmul.mubr.f32.gmra.mrb[0].mxu0 %v396
        %v586 = vpop.f32.mrb[0].mxu0
        %v587 = vadd.f32 0.0, %v586
        %v588 = vpop.f32.mrb[0].mxu0
        %v589 = vadd.f32 0.0, %v588
        %590 = vmatprep.mubr.f32.mxu0 0.0
        %591 = vmatmul.mubr.f32.gmra.mrb[0].mxu0 %v397
        %v592 = vpop.f32.mrb[0].mxu0
        %v593 = vadd.f32 0.0, %v592
        %v594 = vpop.f32.mrb[0].mxu0
        %v595 = vadd.f32 0.0, %v594
        %596 = vmatprep.mubr.f32.mxu0 0.0
        %597 = vmatmul.mubr.f32.gmra.mrb[0].mxu0 %v398
        %v598 = vpop.f32.mrb[0].mxu0
        %v599 = vadd.f32 0.0, %v598
        %v600 = vpop.f32.mrb[0].mxu0
        %v601 = vadd.f32 0.0, %v600
        %602 = vmatprep.mubr.f32.mxu0 0.0
        %603 = vmatmul.mubr.f32.gmra.mrb[0].mxu0 %v399
        %v604 = vpop.f32.mrb[0].mxu0
        %v605 = vadd.f32 0.0, %v604
        %v606 = vpop.f32.mrb[0].mxu0
        %v607 = vadd.f32 0.0, %v606
        %608 = vdwg.mxu0
        %609 = vmatprep.subr.mxu0 %v403
        %610 = vmatpush1.msra.mxu0 %v402
        %611 = vmatprep.subr.mxu0 %v409
        %612 = vmatpush1.msra.mxu0 %v408
        %613 = vmatprep.subr.mxu0 %v415
        %614 = vmatpush1.msra.mxu0 %v414
        %615 = vmatprep.subr.mxu0 %v421
        %616 = vmatpush1.msra.mxu0 %v420
        %617 = vmatprep.subr.mxu0 %v427
        %618 = vmatpush1.msra.mxu0 %v426
        %619 = vmatprep.subr.mxu0 %v433
        %620 = vmatpush1.msra.mxu0 %v432
        %621 = vmatprep.subr.mxu0 %v439
        %622 = vmatpush1.msra.mxu0 %v438
        %623 = vmatprep.subr.mxu0 %v445
        %624 = vmatpush1.msra.mxu0 %v444
        %625 = vmatprep.subr.mxu0 %v451
        %626 = vmatpush1.msra.mxu0 %v450
        %627 = vmatprep.subr.mxu0 %v457
        %628 = vmatpush1.msra.mxu0 %v456
        %629 = vmatprep.subr.mxu0 %v463
        %630 = vmatpush1.msra.mxu0 %v462
        %631 = vmatprep.subr.mxu0 %v469
        %632 = vmatpush1.msra.mxu0 %v468
        %633 = vmatprep.subr.mxu0 %v475
        %634 = vmatpush1.msra.mxu0 %v474
        %635 = vmatprep.subr.mxu0 %v481
        %636 = vmatpush1.msra.mxu0 %v480
        %637 = vmatprep.subr.mxu0 %v487
        %638 = vmatpush1.msra.mxu0 %v486
        %639 = vmatprep.subr.mxu0 %v493
        %640 = vmatpush1.msra.mxu0 %v492
        %641 = vmatprep.subr.mxu0 0.0
        %642 = vmatpush1.msra.mxu0 0.0
        %643 = vmatprep.subr.mxu0 0.0
        %644 = vmatpush1.msra.mxu0 0.0
        %645 = vmatprep.subr.mxu0 0.0
        %646 = vmatpush1.msra.mxu0 0.0
        %647 = vmatprep.subr.mxu0 0.0
        %648 = vmatpush1.msra.mxu0 0.0
        %649 = vmatprep.subr.mxu0 0.0
        %650 = vmatpush1.msra.mxu0 0.0
        %651 = vmatprep.subr.mxu0 0.0
        %652 = vmatpush1.msra.mxu0 0.0
        %653 = vmatprep.subr.mxu0 0.0
        %654 = vmatpush1.msra.mxu0 0.0
        %655 = vmatprep.subr.mxu0 0.0
        %656 = vmatpush1.msra.mxu0 0.0
        %657 = vmatprep.subr.mxu0 0.0
        %658 = vmatpush1.msra.mxu0 0.0
        %659 = vmatprep.subr.mxu0 0.0
        %660 = vmatpush1.msra.mxu0 0.0
        %661 = vmatprep.subr.mxu0 0.0
        %662 = vmatpush1.msra.mxu0 0.0
        %663 = vmatprep.subr.mxu0 0.0
        %664 = vmatpush1.msra.mxu0 0.0
        %665 = vmatprep.subr.mxu0 0.0
        %666 = vmatpush1.msra.mxu0 0.0
        %667 = vmatprep.subr.mxu0 0.0
        %668 = vmatpush1.msra.mxu0 0.0
        %669 = vmatprep.subr.mxu0 0.0
        %670 = vmatpush1.msra.mxu0 0.0
        %671 = vmatprep.subr.mxu0 0.0
        %672 = vmatpush1.msra.mxu0 0.0
        %673 = vmatprep.mubr.f32.mxu0 0.0
        %674 = vmatmul.mubr.f32.gmra.mrb[0].mxu0 %v392
        %v675 = vpop.f32.mrb[0].mxu0
        %v676 = vadd.f32 0.0, %v675
        %v677 = vpop.f32.mrb[0].mxu0
        %v678 = vadd.f32 0.0, %v677
        %679 = vmatprep.mubr.f32.mxu0 0.0
        %680 = vmatmul.mubr.f32.gmra.mrb[0].mxu0 %v393
        %v681 = vpop.f32.mrb[0].mxu0
        %v682 = vadd.f32 0.0, %v681
        %v683 = vpop.f32.mrb[0].mxu0
        %v684 = vadd.f32 0.0, %v683
        %685 = vmatprep.mubr.f32.mxu0 0.0
        %686 = vmatmul.mubr.f32.gmra.mrb[0].mxu0 %v394
        %v687 = vpop.f32.mrb[0].mxu0
        %v688 = vadd.f32 0.0, %v687
        %v689 = vpop.f32.mrb[0].mxu0
        %v690 = vadd.f32 0.0, %v689
        %691 = vmatprep.mubr.f32.mxu0 0.0
        %692 = vmatmul.mubr.f32.gmra.mrb[0].mxu0 %v395
        %v693 = vpop.f32.mrb[0].mxu0
        %v694 = vadd.f32 0.0, %v693
        %v695 = vpop.f32.mrb[0].mxu0
        %v696 = vadd.f32 0.0, %v695
        %697 = vmatprep.mubr.f32.mxu0 0.0
        %698 = vmatmul.mubr.f32.gmra.mrb[0].mxu0 %v396
        %v699 = vpop.f32.mrb[0].mxu0
        %v700 = vadd.f32 0.0, %v699
        %v701 = vpop.f32.mrb[0].mxu0
        %v702 = vadd.f32 0.0, %v701
        %703 = vmatprep.mubr.f32.mxu0 0.0
        %704 = vmatmul.mubr.f32.gmra.mrb[0].mxu0 %v397
        %v705 = vpop.f32.mrb[0].mxu0
        %v706 = vadd.f32 0.0, %v705
        %v707 = vpop.f32.mrb[0].mxu0
        %v708 = vadd.f32 0.0, %v707
        %709 = vmatprep.mubr.f32.mxu0 0.0
        %710 = vmatmul.mubr.f32.gmra.mrb[0].mxu0 %v398
        %v711 = vpop.f32.mrb[0].mxu0
        %v712 = vadd.f32 0.0, %v711
        %v713 = vpop.f32.mrb[0].mxu0
        %v714 = vadd.f32 0.0, %v713
        %715 = vmatprep.mubr.f32.mxu0 0.0
        %716 = vmatmul.mubr.f32.gmra.mrb[0].mxu0 %v399
        %v717 = vpop.f32.mrb[0].mxu0
        %v718 = vadd.f32 0.0, %v717
        %v719 = vpop.f32.mrb[0].mxu0
        %v720 = vadd.f32 0.0, %v719
        %721 = vdwg.mxu0
        %722 = vmatprep.subr.mxu0 %v405
        %723 = vmatpush1.msra.mxu0 %v404
        %724 = vmatprep.subr.mxu0 %v411
        %725 = vmatpush1.msra.mxu0 %v410
        %726 = vmatprep.subr.mxu0 %v417
        %727 = vmatpush1.msra.mxu0 %v416
        %728 = vmatprep.subr.mxu0 %v423
        %729 = vmatpush1.msra.mxu0 %v422
        %730 = vmatprep.subr.mxu0 %v429
        %731 = vmatpush1.msra.mxu0 %v428
        %732 = vmatprep.subr.mxu0 %v435
        %733 = vmatpush1.msra.mxu0 %v434
        %734 = vmatprep.subr.mxu0 %v441
        %735 = vmatpush1.msra.mxu0 %v440
        %736 = vmatprep.subr.mxu0 %v447
        %737 = vmatpush1.msra.mxu0 %v446
        %738 = vmatprep.subr.mxu0 %v453
        %739 = vmatpush1.msra.mxu0 %v452
        %740 = vmatprep.subr.mxu0 %v459
        %741 = vmatpush1.msra.mxu0 %v458
        %742 = vmatprep.subr.mxu0 %v465
        %743 = vmatpush1.msra.mxu0 %v464
        %744 = vmatprep.subr.mxu0 %v471
        %745 = vmatpush1.msra.mxu0 %v470
        %746 = vmatprep.subr.mxu0 %v477
        %747 = vmatpush1.msra.mxu0 %v476
        %748 = vmatprep.subr.mxu0 %v483
        %749 = vmatpush1.msra.mxu0 %v482
        %750 = vmatprep.subr.mxu0 %v489
        %751 = vmatpush1.msra.mxu0 %v488
        %752 = vmatprep.subr.mxu0 %v495
        %753 = vmatpush1.msra.mxu0 %v494
        %754 = vmatprep.subr.mxu0 0.0
        %755 = vmatpush1.msra.mxu0 0.0
        %756 = vmatprep.subr.mxu0 0.0
        %757 = vmatpush1.msra.mxu0 0.0
        %758 = vmatprep.subr.mxu0 0.0
        %759 = vmatpush1.msra.mxu0 0.0
        %760 = vmatprep.subr.mxu0 0.0
        %761 = vmatpush1.msra.mxu0 0.0
        %762 = vmatprep.subr.mxu0 0.0
        %763 = vmatpush1.msra.mxu0 0.0
        %764 = vmatprep.subr.mxu0 0.0
        %765 = vmatpush1.msra.mxu0 0.0
        %766 = vmatprep.subr.mxu0 0.0
        %767 = vmatpush1.msra.mxu0 0.0
        %768 = vmatprep.subr.mxu0 0.0
        %769 = vmatpush1.msra.mxu0 0.0
        %770 = vmatprep.subr.mxu0 0.0
        %771 = vmatpush1.msra.mxu0 0.0
        %772 = vmatprep.subr.mxu0 0.0
        %773 = vmatpush1.msra.mxu0 0.0
        %774 = vmatprep.subr.mxu0 0.0
        %775 = vmatpush1.msra.mxu0 0.0
        %776 = vmatprep.subr.mxu0 0.0
        %777 = vmatpush1.msra.mxu0 0.0
        %778 = vmatprep.subr.mxu0 0.0
        %779 = vmatpush1.msra.mxu0 0.0
        %780 = vmatprep.subr.mxu0 0.0
        %781 = vmatpush1.msra.mxu0 0.0
        %782 = vmatprep.subr.mxu0 0.0
        %783 = vmatpush1.msra.mxu0 0.0
        %784 = vmatprep.subr.mxu0 0.0
        %785 = vmatpush1.msra.mxu0 0.0
        %786 = vmatprep.mubr.f32.mxu0 0.0
        %787 = vmatmul.mubr.f32.gmra.mrb[0].mxu0 %v392
        %v788 = vpop.f32.mrb[0].mxu0
        %v789 = vadd.f32 0.0, %v788
        %v790 = vpop.f32.mrb[0].mxu0
        %v791 = vadd.f32 0.0, %v790
        %792 = vmatprep.mubr.f32.mxu0 0.0
        %793 = vmatmul.mubr.f32.gmra.mrb[0].mxu0 %v393
        %v794 = vpop.f32.mrb[0].mxu0
        %v795 = vadd.f32 0.0, %v794
        %v796 = vpop.f32.mrb[0].mxu0
        %v797 = vadd.f32 0.0, %v796
        %798 = vmatprep.mubr.f32.mxu0 0.0
        %799 = vmatmul.mubr.f32.gmra.mrb[0].mxu0 %v394
        %v800 = vpop.f32.mrb[0].mxu0
        %v801 = vadd.f32 0.0, %v800
        %v802 = vpop.f32.mrb[0].mxu0
        %v803 = vadd.f32 0.0, %v802
        %804 = vmatprep.mubr.f32.mxu0 0.0
        %805 = vmatmul.mubr.f32.gmra.mrb[0].mxu0 %v395
        %v806 = vpop.f32.mrb[0].mxu0
        %v807 = vadd.f32 0.0, %v806
        %v808 = vpop.f32.mrb[0].mxu0
        %v809 = vadd.f32 0.0, %v808
        %810 = vmatprep.mubr.f32.mxu0 0.0
        %811 = vmatmul.mubr.f32.gmra.mrb[0].mxu0 %v396
        %v812 = vpop.f32.mrb[0].mxu0
        %v813 = vadd.f32 0.0, %v812
        %v814 = vpop.f32.mrb[0].mxu0
        %v815 = vadd.f32 0.0, %v814
        %816 = vmatprep.mubr.f32.mxu0 0.0
        %817 = vmatmul.mubr.f32.gmra.mrb[0].mxu0 %v397
        %v818 = vpop.f32.mrb[0].mxu0
        %v819 = vadd.f32 0.0, %v818
        %v820 = vpop.f32.mrb[0].mxu0
        %v821 = vadd.f32 0.0, %v820
        %822 = vmatprep.mubr.f32.mxu0 0.0
        %823 = vmatmul.mubr.f32.gmra.mrb[0].mxu0 %v398
        %v824 = vpop.f32.mrb[0].mxu0
        %v825 = vadd.f32 0.0, %v824
        %v826 = vpop.f32.mrb[0].mxu0
        %v827 = vadd.f32 0.0, %v826
        %828 = vmatprep.mubr.f32.mxu0 0.0
        %829 = vmatmul.mubr.f32.gmra.mrb[0].mxu0 %v399
        %v830 = vpop.f32.mrb[0].mxu0
        %v831 = vadd.f32 0.0, %v830
        %v832 = vpop.f32.mrb[0].mxu0
        %v833 = vadd.f32 0.0, %v832
        %834 = vdwg.mxu0
        %v835 = vld [vmem:[%s327] sm:$0xff]
        %v836 = vld [vmem:[%s327 + $0x8] sm:$0xff]
        %v837 = vld [vmem:[%s327 + $0x10] sm:$0xff]
        %v838 = vld [vmem:[%s327 + $0x18] sm:$0xff]
        %v839 = vld [vmem:[%s327 + $0x20] sm:$0xff]
        %v840 = vld [vmem:[%s327 + $0x28] sm:$0xff]
        %v841 = vld [vmem:[%s327 + $0x30] sm:$0xff]
        %v842 = vld [vmem:[%s327 + $0x38] sm:$0xff]
        %v843 = vld [vmem:[%s336] sm:$0xff]
        %v844 = vld [vmem:[%s336 + $0x8] sm:$0xff]
        %v845 = vld [vmem:[%s336 + $0x10] sm:$0xff]
        %v846 = vld [vmem:[%s336 + $0x18] sm:$0xff]
        %v847 = vld [vmem:[%s336 + $0x20] sm:$0xff]
        %v848 = vld [vmem:[%s336 + $0x28] sm:$0xff]
        %v849 = vld [vmem:[%s336 + $0x30] sm:$0xff]
        %v850 = vld [vmem:[%s336 + $0x38] sm:$0xff]
        %v851 = vld [vmem:[%s345] sm:$0xff]
        %v852 = vld [vmem:[%s345 + $0x8] sm:$0xff]
        %v853 = vld [vmem:[%s345 + $0x10] sm:$0xff]
        %v854 = vld [vmem:[%s345 + $0x18] sm:$0xff]
        %v855 = vld [vmem:[%s345 + $0x20] sm:$0xff]
        %v856 = vld [vmem:[%s345 + $0x28] sm:$0xff]
        %v857 = vld [vmem:[%s345 + $0x30] sm:$0xff]
        %v858 = vld [vmem:[%s345 + $0x38] sm:$0xff]
        %859 = vrot.lane.b32.xlu0 %v563, 127
        %v860 = vpop.permute.xlu0 %859
        %861 = vrot.lane.b32.xlu0 %v569, 127
        %v862 = vpop.permute.xlu0 %861
        %863 = vrot.lane.b32.xlu0 %v575, 127
        %v864 = vpop.permute.xlu0 %863
        %865 = vrot.lane.b32.xlu0 %v581, 127
        %v866 = vpop.permute.xlu0 %865
        %867 = vrot.lane.b32.xlu0 %v587, 127
        %v868 = vpop.permute.xlu0 %867
        %869 = vrot.lane.b32.xlu0 %v593, 127
        %v870 = vpop.permute.xlu0 %869
        %871 = vrot.lane.b32.xlu0 %v599, 127
        %v872 = vpop.permute.xlu0 %871
        %873 = vrot.lane.b32.xlu0 %v605, 127
        %v874 = vpop.permute.xlu0 %873
        %875 = vrot.lane.b32.xlu0 %v563, 1
        %v876 = vpop.permute.xlu0 %875
        %877 = vrot.lane.b32.xlu0 %v569, 1
        %v878 = vpop.permute.xlu0 %877
        %879 = vrot.lane.b32.xlu0 %v575, 1
        %v880 = vpop.permute.xlu0 %879
        %881 = vrot.lane.b32.xlu0 %v581, 1
        %v882 = vpop.permute.xlu0 %881
        %883 = vrot.lane.b32.xlu0 %v587, 1
        %v884 = vpop.permute.xlu0 %883
        %885 = vrot.lane.b32.xlu0 %v593, 1
        %v886 = vpop.permute.xlu0 %885
        %887 = vrot.lane.b32.xlu0 %v599, 1
        %v888 = vpop.permute.xlu0 %887
        %889 = vrot.lane.b32.xlu0 %v605, 1
        %v890 = vpop.permute.xlu0 %889
        %v891 = vmul.f32 %v563, %v835
        %v892 = vmul.f32 %v569, %v836
        %v893 = vmul.f32 %v575, %v837
        %v894 = vmul.f32 %v581, %v838
        %v895 = vmul.f32 %v587, %v839
        %v896 = vmul.f32 %v593, %v840
        %v897 = vmul.f32 %v599, %v841
        %v898 = vmul.f32 %v605, %v842
        %v899 = vmul.f32 %v860, %v843
        %v900 = vmul.f32 %v862, %v844
        %v901 = vmul.f32 %v864, %v845
        %v902 = vmul.f32 %v866, %v846
        %v903 = vmul.f32 %v868, %v847
        %v904 = vmul.f32 %v870, %v848
        %v905 = vmul.f32 %v872, %v849
        %v906 = vmul.f32 %v874, %v850
        %v907 = vadd.f32 %v891, %v899
        %v908 = vadd.f32 %v892, %v900
        %v909 = vadd.f32 %v893, %v901
        %v910 = vadd.f32 %v894, %v902
        %v911 = vadd.f32 %v895, %v903
        %v912 = vadd.f32 %v896, %v904
        %v913 = vadd.f32 %v897, %v905
        %v914 = vadd.f32 %v898, %v906
        %v915 = vmul.f32 %v876, %v851
        %v916 = vmul.f32 %v878, %v852
        %v917 = vmul.f32 %v880, %v853
        %v918 = vmul.f32 %v882, %v854
        %v919 = vmul.f32 %v884, %v855
        %v920 = vmul.f32 %v886, %v856
        %v921 = vmul.f32 %v888, %v857
        %v922 = vmul.f32 %v890, %v858
        %v923 = vadd.f32 %v907, %v915
        %v924 = vadd.f32 %v908, %v916
        %v925 = vadd.f32 %v909, %v917
        %v926 = vadd.f32 %v910, %v918
        %v927 = vadd.f32 %v911, %v919
        %v928 = vadd.f32 %v912, %v920
        %v929 = vadd.f32 %v913, %v921
        %v930 = vadd.f32 %v914, %v922
        %931 = vrot.lane.b32.xlu0 %v565, 127
        %v932 = vpop.permute.xlu0 %931
        %933 = vrot.lane.b32.xlu0 %v571, 127
        %v934 = vpop.permute.xlu0 %933
        %935 = vrot.lane.b32.xlu0 %v577, 127
        %v936 = vpop.permute.xlu0 %935
        %937 = vrot.lane.b32.xlu0 %v583, 127
        %v938 = vpop.permute.xlu0 %937
        %939 = vrot.lane.b32.xlu0 %v589, 127
        %v940 = vpop.permute.xlu0 %939
        %941 = vrot.lane.b32.xlu0 %v595, 127
        %v942 = vpop.permute.xlu0 %941
        %943 = vrot.lane.b32.xlu0 %v601, 127
        %v944 = vpop.permute.xlu0 %943
        %945 = vrot.lane.b32.xlu0 %v607, 127
        %v946 = vpop.permute.xlu0 %945
        %947 = vrot.lane.b32.xlu0 %v565, 1
        %v948 = vpop.permute.xlu0 %947
        %949 = vrot.lane.b32.xlu0 %v571, 1
        %v950 = vpop.permute.xlu0 %949
        %951 = vrot.lane.b32.xlu0 %v577, 1
        %v952 = vpop.permute.xlu0 %951
        %953 = vrot.lane.b32.xlu0 %v583, 1
        %v954 = vpop.permute.xlu0 %953
        %955 = vrot.lane.b32.xlu0 %v589, 1
        %v956 = vpop.permute.xlu0 %955
        %957 = vrot.lane.b32.xlu0 %v595, 1
        %v958 = vpop.permute.xlu0 %957
        %959 = vrot.lane.b32.xlu0 %v601, 1
        %v960 = vpop.permute.xlu0 %959
        %961 = vrot.lane.b32.xlu0 %v607, 1
        %v962 = vpop.permute.xlu0 %961
        %v963 = vmul.f32 %v565, %v835
        %v964 = vmul.f32 %v571, %v836
        %v965 = vmul.f32 %v577, %v837
        %v966 = vmul.f32 %v583, %v838
        %v967 = vmul.f32 %v589, %v839
        %v968 = vmul.f32 %v595, %v840
        %v969 = vmul.f32 %v601, %v841
        %v970 = vmul.f32 %v607, %v842
        %v971 = vmul.f32 %v932, %v843
        %v972 = vmul.f32 %v934, %v844
        %v973 = vmul.f32 %v936, %v845
        %v974 = vmul.f32 %v938, %v846
        %v975 = vmul.f32 %v940, %v847
        %v976 = vmul.f32 %v942, %v848
        %v977 = vmul.f32 %v944, %v849
        %v978 = vmul.f32 %v946, %v850
        %v979 = vadd.f32 %v963, %v971
        %v980 = vadd.f32 %v964, %v972
        %v981 = vadd.f32 %v965, %v973
        %v982 = vadd.f32 %v966, %v974
        %v983 = vadd.f32 %v967, %v975
        %v984 = vadd.f32 %v968, %v976
        %v985 = vadd.f32 %v969, %v977
        %v986 = vadd.f32 %v970, %v978
        %v987 = vmul.f32 %v948, %v851
        %v988 = vmul.f32 %v950, %v852
        %v989 = vmul.f32 %v952, %v853
        %v990 = vmul.f32 %v954, %v854
        %v991 = vmul.f32 %v956, %v855
        %v992 = vmul.f32 %v958, %v856
        %v993 = vmul.f32 %v960, %v857
        %v994 = vmul.f32 %v962, %v858
        %v995 = vadd.f32 %v979, %v987
        %v996 = vadd.f32 %v980, %v988
        %v997 = vadd.f32 %v981, %v989
        %v998 = vadd.f32 %v982, %v990
        %v999 = vadd.f32 %v983, %v991
        %v1000 = vadd.f32 %v984, %v992
        %v1001 = vadd.f32 %v985, %v993
        %v1002 = vadd.f32 %v986, %v994
        %1003 = vrot.lane.b32.xlu0 %v676, 127
        %v1004 = vpop.permute.xlu0 %1003
        %1005 = vrot.lane.b32.xlu0 %v682, 127
        %v1006 = vpop.permute.xlu0 %1005
        %1007 = vrot.lane.b32.xlu0 %v688, 127
        %v1008 = vpop.permute.xlu0 %1007
        %1009 = vrot.lane.b32.xlu0 %v694, 127
        %v1010 = vpop.permute.xlu0 %1009
        %1011 = vrot.lane.b32.xlu0 %v700, 127
        %v1012 = vpop.permute.xlu0 %1011
        %1013 = vrot.lane.b32.xlu0 %v706, 127
        %v1014 = vpop.permute.xlu0 %1013
        %1015 = vrot.lane.b32.xlu0 %v712, 127
        %v1016 = vpop.permute.xlu0 %1015
        %1017 = vrot.lane.b32.xlu0 %v718, 127
        %v1018 = vpop.permute.xlu0 %1017
        %1019 = vrot.lane.b32.xlu0 %v676, 1
        %v1020 = vpop.permute.xlu0 %1019
        %1021 = vrot.lane.b32.xlu0 %v682, 1
        %v1022 = vpop.permute.xlu0 %1021
        %1023 = vrot.lane.b32.xlu0 %v688, 1
        %v1024 = vpop.permute.xlu0 %1023
        %1025 = vrot.lane.b32.xlu0 %v694, 1
        %v1026 = vpop.permute.xlu0 %1025
        %1027 = vrot.lane.b32.xlu0 %v700, 1
        %v1028 = vpop.permute.xlu0 %1027
        %1029 = vrot.lane.b32.xlu0 %v706, 1
        %v1030 = vpop.permute.xlu0 %1029
        %1031 = vrot.lane.b32.xlu0 %v712, 1
        %v1032 = vpop.permute.xlu0 %1031
        %1033 = vrot.lane.b32.xlu0 %v718, 1
        %v1034 = vpop.permute.xlu0 %1033
        %v1035 = vmul.f32 %v676, %v835
        %v1036 = vmul.f32 %v682, %v836
        %v1037 = vmul.f32 %v688, %v837
        %v1038 = vmul.f32 %v694, %v838
        %v1039 = vmul.f32 %v700, %v839
        %v1040 = vmul.f32 %v706, %v840
        %v1041 = vmul.f32 %v712, %v841
        %v1042 = vmul.f32 %v718, %v842
        %v1043 = vmul.f32 %v1004, %v843
        %v1044 = vmul.f32 %v1006, %v844
        %v1045 = vmul.f32 %v1008, %v845
        %v1046 = vmul.f32 %v1010, %v846
        %v1047 = vmul.f32 %v1012, %v847
        %v1048 = vmul.f32 %v1014, %v848
        %v1049 = vmul.f32 %v1016, %v849
        %v1050 = vmul.f32 %v1018, %v850
        %v1051 = vadd.f32 %v1035, %v1043
        %v1052 = vadd.f32 %v1036, %v1044
        %v1053 = vadd.f32 %v1037, %v1045
        %v1054 = vadd.f32 %v1038, %v1046
        %v1055 = vadd.f32 %v1039, %v1047
        %v1056 = vadd.f32 %v1040, %v1048
        %v1057 = vadd.f32 %v1041, %v1049
        %v1058 = vadd.f32 %v1042, %v1050
        %v1059 = vmul.f32 %v1020, %v851
        %v1060 = vmul.f32 %v1022, %v852
        %v1061 = vmul.f32 %v1024, %v853
        %v1062 = vmul.f32 %v1026, %v854
        %v1063 = vmul.f32 %v1028, %v855
        %v1064 = vmul.f32 %v1030, %v856
        %v1065 = vmul.f32 %v1032, %v857
        %v1066 = vmul.f32 %v1034, %v858
        %v1067 = vadd.f32 %v1051, %v1059
        %v1068 = vadd.f32 %v1052, %v1060
        %v1069 = vadd.f32 %v1053, %v1061
        %v1070 = vadd.f32 %v1054, %v1062
        %v1071 = vadd.f32 %v1055, %v1063
        %v1072 = vadd.f32 %v1056, %v1064
        %v1073 = vadd.f32 %v1057, %v1065
        %v1074 = vadd.f32 %v1058, %v1066
        %1075 = vrot.lane.b32.xlu0 %v678, 127
        %v1076 = vpop.permute.xlu0 %1075
        %1077 = vrot.lane.b32.xlu0 %v684, 127
        %v1078 = vpop.permute.xlu0 %1077
        %1079 = vrot.lane.b32.xlu0 %v690, 127
        %v1080 = vpop.permute.xlu0 %1079
        %1081 = vrot.lane.b32.xlu0 %v696, 127
        %v1082 = vpop.permute.xlu0 %1081
        %1083 = vrot.lane.b32.xlu0 %v702, 127
        %v1084 = vpop.permute.xlu0 %1083
        %1085 = vrot.lane.b32.xlu0 %v708, 127
        %v1086 = vpop.permute.xlu0 %1085
        %1087 = vrot.lane.b32.xlu0 %v714, 127
        %v1088 = vpop.permute.xlu0 %1087
        %1089 = vrot.lane.b32.xlu0 %v720, 127
        %v1090 = vpop.permute.xlu0 %1089
        %1091 = vrot.lane.b32.xlu0 %v678, 1
        %v1092 = vpop.permute.xlu0 %1091
        %1093 = vrot.lane.b32.xlu0 %v684, 1
        %v1094 = vpop.permute.xlu0 %1093
        %1095 = vrot.lane.b32.xlu0 %v690, 1
        %v1096 = vpop.permute.xlu0 %1095
        %1097 = vrot.lane.b32.xlu0 %v696, 1
        %v1098 = vpop.permute.xlu0 %1097
        %1099 = vrot.lane.b32.xlu0 %v702, 1
        %v1100 = vpop.permute.xlu0 %1099
        %1101 = vrot.lane.b32.xlu0 %v708, 1
        %v1102 = vpop.permute.xlu0 %1101
        %1103 = vrot.lane.b32.xlu0 %v714, 1
        %v1104 = vpop.permute.xlu0 %1103
        %1105 = vrot.lane.b32.xlu0 %v720, 1
        %v1106 = vpop.permute.xlu0 %1105
        %v1107 = vmul.f32 %v678, %v835
        %v1108 = vmul.f32 %v684, %v836
        %v1109 = vmul.f32 %v690, %v837
        %v1110 = vmul.f32 %v696, %v838
        %v1111 = vmul.f32 %v702, %v839
        %v1112 = vmul.f32 %v708, %v840
        %v1113 = vmul.f32 %v714, %v841
        %v1114 = vmul.f32 %v720, %v842
        %v1115 = vmul.f32 %v1076, %v843
        %v1116 = vmul.f32 %v1078, %v844
        %v1117 = vmul.f32 %v1080, %v845
        %v1118 = vmul.f32 %v1082, %v846
        %v1119 = vmul.f32 %v1084, %v847
        %v1120 = vmul.f32 %v1086, %v848
        %v1121 = vmul.f32 %v1088, %v849
        %v1122 = vmul.f32 %v1090, %v850
        %v1123 = vadd.f32 %v1107, %v1115
        %v1124 = vadd.f32 %v1108, %v1116
        %v1125 = vadd.f32 %v1109, %v1117
        %v1126 = vadd.f32 %v1110, %v1118
        %v1127 = vadd.f32 %v1111, %v1119
        %v1128 = vadd.f32 %v1112, %v1120
        %v1129 = vadd.f32 %v1113, %v1121
        %v1130 = vadd.f32 %v1114, %v1122
        %v1131 = vmul.f32 %v1092, %v851
        %v1132 = vmul.f32 %v1094, %v852
        %v1133 = vmul.f32 %v1096, %v853
        %v1134 = vmul.f32 %v1098, %v854
        %v1135 = vmul.f32 %v1100, %v855
        %v1136 = vmul.f32 %v1102, %v856
        %v1137 = vmul.f32 %v1104, %v857
        %v1138 = vmul.f32 %v1106, %v858
        %v1139 = vadd.f32 %v1123, %v1131
        %v1140 = vadd.f32 %v1124, %v1132
        %v1141 = vadd.f32 %v1125, %v1133
        %v1142 = vadd.f32 %v1126, %v1134
        %v1143 = vadd.f32 %v1127, %v1135
        %v1144 = vadd.f32 %v1128, %v1136
        %v1145 = vadd.f32 %v1129, %v1137
        %v1146 = vadd.f32 %v1130, %v1138
        %1147 = vst [vmem:[%s386] sm:$0xff] %v923
        %1148 = vst [vmem:[%s386 + $0x8] sm:$0xff] %v995
        %1149 = vst [vmem:[%s386 + $0x10] sm:$0xff] %v1067
        %1150 = vst [vmem:[%s386 + $0x18] sm:$0xff] %v1139
        %1151 = vst [vmem:[%s386 + $0x20] sm:$0xff] %v789
        %1152 = vst [vmem:[%s386 + $0x28] sm:$0xff] %v791
        %1153 = vst [vmem:[%s386 + $0x30] sm:$0xff] %v924
        %1154 = vst [vmem:[%s386 + $0x38] sm:$0xff] %v996
        %1155 = vst [vmem:[%s386 + $0x40] sm:$0xff] %v1068
        %1156 = vst [vmem:[%s386 + $0x48] sm:$0xff] %v1140
        %1157 = vst [vmem:[%s386 + $0x50] sm:$0xff] %v795
        %1158 = vst [vmem:[%s386 + $0x58] sm:$0xff] %v797
        %1159 = vst [vmem:[%s386 + $0x60] sm:$0xff] %v925
        %1160 = vst [vmem:[%s386 + $0x68] sm:$0xff] %v997
        %1161 = vst [vmem:[%s386 + $0x70] sm:$0xff] %v1069
        %1162 = vst [vmem:[%s386 + $0x78] sm:$0xff] %v1141
        %1163 = vst [vmem:[%s386 + $0x80] sm:$0xff] %v801
        %1164 = vst [vmem:[%s386 + $0x88] sm:$0xff] %v803
        %1165 = vst [vmem:[%s386 + $0x90] sm:$0xff] %v926
        %1166 = vst [vmem:[%s386 + $0x98] sm:$0xff] %v998
        %1167 = vst [vmem:[%s386 + $0xa0] sm:$0xff] %v1070
        %1168 = vst [vmem:[%s386 + $0xa8] sm:$0xff] %v1142
        %1169 = vst [vmem:[%s386 + $0xb0] sm:$0xff] %v807
        %1170 = vst [vmem:[%s386 + $0xb8] sm:$0xff] %v809
        %1171 = vst [vmem:[%s386 + $0xc0] sm:$0xff] %v927
        %1172 = vst [vmem:[%s386 + $0xc8] sm:$0xff] %v999
        %1173 = vst [vmem:[%s386 + $0xd0] sm:$0xff] %v1071
        %1174 = vst [vmem:[%s386 + $0xd8] sm:$0xff] %v1143
        %1175 = vst [vmem:[%s386 + $0xe0] sm:$0xff] %v813
        %1176 = vst [vmem:[%s386 + $0xe8] sm:$0xff] %v815
        %1177 = vst [vmem:[%s386 + $0xf0] sm:$0xff] %v928
        %1178 = vst [vmem:[%s386 + $0xf8] sm:$0xff] %v1000
        %1179 = vst [vmem:[%s386 + $0x100] sm:$0xff] %v1072
        %1180 = vst [vmem:[%s386 + $0x108] sm:$0xff] %v1144
        %1181 = vst [vmem:[%s386 + $0x110] sm:$0xff] %v819
        %1182 = vst [vmem:[%s386 + $0x118] sm:$0xff] %v821
        %1183 = vst [vmem:[%s386 + $0x120] sm:$0xff] %v929
        %1184 = vst [vmem:[%s386 + $0x128] sm:$0xff] %v1001
        %1185 = vst [vmem:[%s386 + $0x130] sm:$0xff] %v1073
        %1186 = vst [vmem:[%s386 + $0x138] sm:$0xff] %v1145
        %1187 = vst [vmem:[%s386 + $0x140] sm:$0xff] %v825
        %1188 = vst [vmem:[%s386 + $0x148] sm:$0xff] %v827
        %1189 = vst [vmem:[%s386 + $0x150] sm:$0xff] %v930
        %1190 = vst [vmem:[%s386 + $0x158] sm:$0xff] %v1002
        %1191 = vst [vmem:[%s386 + $0x160] sm:$0xff] %v1074
        %1192 = vst [vmem:[%s386 + $0x168] sm:$0xff] %v1146
        %1193 = vst [vmem:[%s386 + $0x170] sm:$0xff] %v831
        %1194 = vst [vmem:[%s386 + $0x178] sm:$0xff] %v833
        %s1195 = sand.u32 %s172, 1
        %s1196 = scalar_lea.sflag [#allocation4], %s1195
        %s1197 = sand.u32 %s172, 1
        %s1198 = smul.addr %s1197, 384
        %s1199 = scalar_lea.vmem [#allocation10], %s1198
        // Predicated region
        $region61: #{tpu_custom_call.1} parent=39 // pred_check
          %p1200 = pneg %p182
        $region62: #{tpu_custom_call.1} parent=39 // pred_check_branch
          %1202 = sbr.rel (%p1200) target = $region64
        $region63: #{tpu_custom_call.1} parent=39 // pred_region
          %s1203 = smul.u32 8, %s27
          %s1205 = ssub.s32 6144, 6144
          %1206 = vsyncadd %s1196, %s1205
          %s1207 = smul.addr %s1203, 6
          %s1208 = smul.addr %s28, 96
          %s1209 = sadd.s32 %s1207, %s1208
          %s1210 = smul.addr %s1209, 128
          %s1211 = scalar_lea.hbm %s5, %s1210
          %s1212 = sshll.u32 %s1199, 4
          %s1213 = int_to_ptr.vmem [resolvable:$true] %s1212
          %1218 = dma.vmem_to_hbm [thread:$0]  %s1213, 6144, %s1211, %s1196, 768, 768, 48
        $region64: #{tpu_custom_call.1} parent=39 // pred_fallthru
          _
      $region40: #{tpu_custom_call.1} parent=5 // pred_fallthru
        _
      %p1219 = scmp.le.s32.totalorder 2, %s18
      // Predicated region
      $region65: #{tpu_custom_call.1} parent=5 // pred_check
        %p1220 = pneg %p1219
      $region66: #{tpu_custom_call.1} parent=5 // pred_check_branch
        %1222 = sbr.rel (%p1220) target = $region68
      $region67: #{tpu_custom_call.1} parent=5 // pred_region
        %s1223 = ssub.s32 %s18, 2
        // Predicated region
        $region69: #{tpu_custom_call.1} parent=67 // pred_check
          %p1224 = pneg %p188
        $region70: #{tpu_custom_call.1} parent=67 // pred_check_branch
          %1226 = sbr.rel (%p1224) target = $region72
        $region71: #{tpu_custom_call.1} parent=67 // pred_region
          %s1227 = sand.u32 %s173, 1
          %s1228 = scalar_lea.sflag [#allocation4], %s1227
          %s1229 = sand.u32 %s173, 1
          %s1230 = smul.addr %s1229, 384
          %s1231 = scalar_lea.vmem [#allocation10], %s1230
          %1232 = dma.done %s1228, 6144
        $region72: #{tpu_custom_call.1} parent=67 // pred_fallthru
          _
      $region68: #{tpu_custom_call.1} parent=5 // pred_fallthru
        _
    $region6: #{tpu_custom_call.1} parent=1 // loop_footer
      %s22 = sadd.s32 1, %s18
    $region7: #{tpu_custom_call.1} parent=1 // loop_footer_branch
      %17 = sbr.rel target = $region3
    $region8: #{tpu_custom_call.1} parent=1 // loop_exit
      _
    %1233 = vsyncpa [#allocation3], 1
    %s1234 = scalar_lea.sflag [#allocation3], 1
    %1235 = vsyncpa %s1234, 1
    %1236 = vsyncpa [#allocation6], 1
    %1237 = vsyncpa [#allocation4], 1
    %s1238 = scalar_lea.sflag [#allocation4], 1
    %1239 = vsyncpa %s1238, 1

</llo_original>
